<compile_context>
chip_gen: v7x
topology: tpu7x:2x2x1
jax: 0.10.0
libtpu: 0.0.40
codegen_flags: <defaults>
</compile_context>

<pallas_src>
import functools

import jax
import jax.numpy as jnp
from jax.experimental import pallas as pl
from jax.experimental.pallas import tpu as pltpu


# ----------------------------- Pallas kernel ------------------------------ #
def critic_kernel(xt_ref, at_ref, w1o_ref, w1a_ref, b1_ref, w2_ref, b2_ref,
                  w3c_ref, b3_ref, o_ref):
    # fc1: h1^T = W1_obs @ x^T + W1_act @ a^T  (bf16 MXU operands, f32 accum).
    # TODO(synk): optionally sublane-concat xt/at in VMEM and issue one K=24
    # dot; kept split (identical MXU cost, avoids any concat lowering risk).
    h1 = jnp.dot(w1o_ref[...], xt_ref[...],
                 preferred_element_type=jnp.float32)
    h1 = h1 + jnp.dot(w1a_ref[...], at_ref[...],
                      preferred_element_type=jnp.float32)
    h1 = jnp.maximum(h1 + b1_ref[...], 0.0)            # (400, tile_b) f32, VPU

    # fc2: bf16 operands, f32 accumulate.
    h2 = jnp.dot(w2_ref[...], h1.astype(jnp.bfloat16),
                 preferred_element_type=jnp.float32)
    h2 = jnp.maximum(h2 + b2_ref[...], 0.0)            # (300, tile_b) f32, VPU

    # fc3 (out width 1): f32 VPU multiply + sublane reduction -> lane-dense
    # (1, tile_b) row; an MXU matmul here would use 1 of 128/256 out columns.
    q = jnp.sum(h2 * w3c_ref[...], axis=0, keepdims=True) + b3_ref[...]
    o_ref[...] = q.astype(o_ref.dtype)                 # unmasked dense store


# ------------------------ one-time parameter prep -------------------------- #
def prepare_critic_params(params, obs_dim):
    """Cast/lay out params once (not per forward call).

    params are in PyTorch layout: w (out,in), b (out,)."""
    w1, b1, w2, b2, w3, b3 = params
    bf16 = jnp.bfloat16
    return dict(
        w1o=w1[:, :obs_dim].astype(bf16),            # (400, obs_dim)  bf16
        w1a=w1[:, obs_dim:].astype(bf16),            # (400, act_dim)  bf16
        b1=b1.reshape(-1, 1).astype(jnp.float32),    # (400, 1)        f32
        w2=w2.astype(bf16),                          # (300, 400)      bf16
        b2=b2.reshape(-1, 1).astype(jnp.float32),    # (300, 1)        f32
        w3c=w3.reshape(-1, 1).astype(jnp.float32),   # (300, 1)        f32
        b3=b3.reshape(1, 1).astype(jnp.float32),     # (1, 1)          f32
    )


# ------------------------------ host wrapper ------------------------------ #
@functools.partial(jax.jit, static_argnames=("tile_b",))
def dummy_critic_forward(x, action, prep, tile_b=2048):
    """x: (B, obs_dim), action: (B, action_dim) -> (B, 1) float32."""
    B, obs_dim = x.shape
    action_dim = action.shape[1]
    in_dim = obs_dim + action_dim
    bf16 = jnp.bfloat16

    # bf16 cast + transpose fuse into a single XLA pass over the activations.
    xt = x.astype(bf16).T          # (obs_dim, B)
    at = action.astype(bf16).T     # (action_dim, B)

    if B <= tile_b:
        tile_b = B
        grid_b = 1
    else:
        tile_b = max(128, (tile_b // 128) * 128)   # lane-aligned tiles
        grid_b = pl.cdiv(B, tile_b)
    padded_B = grid_b * tile_b
    if padded_B != B:
        # Pads the small transposed bf16 copies (fuses with the cast above);
        # tail columns compute garbage and are sliced off below.
        xt = jnp.pad(xt, ((0, 0), (0, padded_B - B)))
        at = jnp.pad(at, ((0, 0), (0, padded_B - B)))

    def act_spec(rows):
        return pl.BlockSpec((rows, tile_b), lambda i: (0, i))

    def resident(arr):
        return pl.BlockSpec(arr.shape, lambda i: (0, 0))

    flops = 2 * padded_B * (in_dim * 400 + 400 * 300 + 300)
    bytes_accessed = (
        (xt.size + at.size) * 2                                    # bf16 acts
        + (prep["w1o"].size + prep["w1a"].size + prep["w2"].size) * 2
        + (prep["b1"].size + prep["b2"].size
           + prep["w3c"].size + prep["b3"].size) * 4
        + padded_B * 4                                             # f32 out
    )

    out = pl.pallas_call(
        critic_kernel,
        out_shape=jax.ShapeDtypeStruct((1, padded_B), jnp.float32),
        grid=(grid_b,),
        in_specs=[
            act_spec(obs_dim), act_spec(action_dim),
            resident(prep["w1o"]), resident(prep["w1a"]), resident(prep["b1"]),
            resident(prep["w2"]), resident(prep["b2"]),
            resident(prep["w3c"]), resident(prep["b3"]),
        ],
        out_specs=pl.BlockSpec((1, tile_b), lambda i: (0, i)),
        compiler_params=pltpu.CompilerParams(
            dimension_semantics=("parallel",),      # megacore sharding on v7x
            vmem_limit_bytes=32 * 1024 * 1024),
        cost_estimate=pl.CostEstimate(flops=flops, transcendentals=0,
                                      bytes_accessed=bytes_accessed),
    )(xt, at, prep["w1o"], prep["w1a"], prep["b1"],
      prep["w2"], prep["b2"], prep["w3c"], prep["b3"])

    return out[0, :B].reshape(B, 1)


# ------------------------- deterministic parameters ------------------------ #
def xavier_uniform(key, out_dim, in_dim, dtype=jnp.float32):
    # Matches torch.nn.init.xavier_uniform_ (gain=1) on a (out,in) weight.
    bound = (6.0 / (in_dim + out_dim)) ** 0.5
    return jax.random.uniform(key, (out_dim, in_dim), dtype, -bound, bound)


def make_params(key, obs_dim, action_dim):
    k1, k2, k3 = jax.random.split(key, 3)
    in_dim = obs_dim + action_dim
    w1 = xavier_uniform(k1, 400, in_dim)
    b1 = jnp.zeros((400,), jnp.float32)
    w2 = xavier_uniform(k2, 300, 400)
    b2 = jnp.zeros((300,), jnp.float32)
    w3 = xavier_uniform(k3, 1, 300)
    b3 = jnp.zeros((1,), jnp.float32)
    return w1, b1, w2, b2, w3, b3


# ---------------------------------- main ----------------------------------- #
if __name__ == "__main__":
    key = jax.random.PRNGKey(0)
    k_x, k_a, k_p = jax.random.split(key, 3)

    batch, obs_dim, action_dim = 4, 16, 8
    x = jax.random.normal(k_x, (batch, obs_dim), jnp.float32)
    action = jax.random.normal(k_a, (batch, action_dim), jnp.float32)
    params = make_params(k_p, obs_dim, action_dim)
    prep = prepare_critic_params(params, obs_dim)

    out = dummy_critic_forward(x, action, prep)
    out = jax.block_until_ready(out)
    assert out.shape == (batch, 1)

    # Reference 1: identical math (bf16 MXU operands, f32 accum) in plain JAX.
    bf16 = jnp.bfloat16
    xt = x.astype(bf16).T
    at = action.astype(bf16).T
    h1 = (jnp.dot(prep["w1o"], xt, preferred_element_type=jnp.float32)
          + jnp.dot(prep["w1a"], at, preferred_element_type=jnp.float32))
    h1 = jnp.maximum(h1 + prep["b1"], 0.0)
    h2 = jnp.dot(prep["w2"], h1.astype(bf16),
                 preferred_element_type=jnp.float32)
    h2 = jnp.maximum(h2 + prep["b2"], 0.0)
    ref_bf16 = (jnp.sum(h2 * prep["w3c"], axis=0, keepdims=True)
                + prep["b3"])[0].reshape(batch, 1)
    assert jnp.allclose(out, ref_bf16, atol=1e-3, rtol=1e-3)

    # Reference 2: full-f32 PyTorch-module math (looser tol covers bf16 ops).
    w1, b1, w2, b2, w3, b3 = params
    xa = jnp.concatenate([x, action], axis=-1)
    ref_f32 = jnp.maximum(xa @ w1.T + b1, 0.0)
    ref_f32 = jnp.maximum(ref_f32 @ w2.T + b2, 0.0)
    ref_f32 = ref_f32 @ w3.T + b3
    assert jnp.allclose(out, ref_f32, atol=5e-2, rtol=5e-2)

    print("KERNEL_OK")
</pallas_src>

<mosaic_0001>
module attributes {stable_mosaic.version = 11 : i64} {
  func.func @critic_kernel(%arg0: i32, %arg1: memref<16x4xbf16, #tpu.memory_space<vmem>>, %arg2: memref<8x4xbf16, #tpu.memory_space<vmem>>, %arg3: memref<400x16xbf16, #tpu.memory_space<vmem>>, %arg4: memref<400x8xbf16, #tpu.memory_space<vmem>>, %arg5: memref<400x1xf32, #tpu.memory_space<vmem>>, %arg6: memref<300x400xbf16, #tpu.memory_space<vmem>>, %arg7: memref<300x1xf32, #tpu.memory_space<vmem>>, %arg8: memref<300x1xf32, #tpu.memory_space<vmem>>, %arg9: memref<1x1xf32, #tpu.memory_space<vmem>>, %arg10: memref<1x4xf32, #tpu.memory_space<vmem>>) attributes {dimension_semantics = [#tpu.dimension_semantics<parallel>], iteration_bounds = array<i64: 1>, scalar_prefetch = 0 : i64, scratch_operands = 0 : i64, tpu.core_type = #tpu.core_type<tc>, window_params = [{transform_indices = @transform_0, window_bounds = array<i64: 16, 4>}, {transform_indices = @transform_1, window_bounds = array<i64: 8, 4>}, {pipeline_mode = #tpu.pipeline_mode<synchronous>, transform_indices = @transform_2, window_bounds = array<i64: 400, 16>}, {pipeline_mode = #tpu.pipeline_mode<synchronous>, transform_indices = @transform_3, window_bounds = array<i64: 400, 8>}, {pipeline_mode = #tpu.pipeline_mode<synchronous>, transform_indices = @transform_4, window_bounds = array<i64: 400, 1>}, {pipeline_mode = #tpu.pipeline_mode<synchronous>, transform_indices = @transform_5, window_bounds = array<i64: 300, 400>}, {pipeline_mode = #tpu.pipeline_mode<synchronous>, transform_indices = @transform_6, window_bounds = array<i64: 300, 1>}, {pipeline_mode = #tpu.pipeline_mode<synchronous>, transform_indices = @transform_7, window_bounds = array<i64: 300, 1>}, {pipeline_mode = #tpu.pipeline_mode<synchronous>, transform_indices = @transform_8, window_bounds = array<i64: 1, 1>}, {transform_indices = @transform_9, window_bounds = array<i64: 1, 4>}]} {
    %c0 = arith.constant 0 : index
    %c0_0 = arith.constant 0 : index
    %0 = vector.load %arg3[%c0, %c0_0] : memref<400x16xbf16, #tpu.memory_space<vmem>>, vector<400x16xbf16>
    %c0_1 = arith.constant 0 : index
    %c0_2 = arith.constant 0 : index
    %1 = vector.load %arg1[%c0_1, %c0_2] : memref<16x4xbf16, #tpu.memory_space<vmem>>, vector<16x4xbf16>
    %cst = arith.constant dense<0.000000e+00> : vector<400x4xf32>
    %2 = tpu.matmul %0, %1, %cst {dimension_numbers = #tpu.dot_dimension_numbers<[1], [0], [0], [1], [0, 0, 1, 1], [], []>} : vector<400x16xbf16>, vector<16x4xbf16>, vector<400x4xf32> -> vector<400x4xf32>
    %c0_3 = arith.constant 0 : index
    %c0_4 = arith.constant 0 : index
    %3 = vector.load %arg4[%c0_3, %c0_4] : memref<400x8xbf16, #tpu.memory_space<vmem>>, vector<400x8xbf16>
    %c0_5 = arith.constant 0 : index
    %c0_6 = arith.constant 0 : index
    %4 = vector.load %arg2[%c0_5, %c0_6] : memref<8x4xbf16, #tpu.memory_space<vmem>>, vector<8x4xbf16>
    %cst_7 = arith.constant dense<0.000000e+00> : vector<400x4xf32>
    %5 = tpu.matmul %3, %4, %cst_7 {dimension_numbers = #tpu.dot_dimension_numbers<[1], [0], [0], [1], [0, 0, 1, 1], [], []>} : vector<400x8xbf16>, vector<8x4xbf16>, vector<400x4xf32> -> vector<400x4xf32>
    %6 = arith.addf %2, %5 : vector<400x4xf32>
    %c0_8 = arith.constant 0 : index
    %c0_9 = arith.constant 0 : index
    %7 = vector.load %arg5[%c0_8, %c0_9] : memref<400x1xf32, #tpu.memory_space<vmem>>, vector<400x1xf32>
    %8 = vector.broadcast %7 : vector<400x1xf32> to vector<400x4xf32>
    %9 = arith.addf %6, %8 : vector<400x4xf32>
    %cst_10 = arith.constant 0.000000e+00 : f32
    %10 = vector.broadcast %cst_10 : f32 to vector<400x4xf32>
    %11 = arith.maximumf %9, %10 : vector<400x4xf32>
    %c0_11 = arith.constant 0 : index
    %c0_12 = arith.constant 0 : index
    %12 = vector.load %arg6[%c0_11, %c0_12] : memref<300x400xbf16, #tpu.memory_space<vmem>>, vector<300x400xbf16>
    %13 = arith.truncf %11 : vector<400x4xf32> to vector<400x4xbf16>
    %cst_13 = arith.constant dense<0.000000e+00> : vector<300x4xf32>
    %14 = tpu.matmul %12, %13, %cst_13 {dimension_numbers = #tpu.dot_dimension_numbers<[1], [0], [0], [1], [0, 0, 1, 1], [], []>} : vector<300x400xbf16>, vector<400x4xbf16>, vector<300x4xf32> -> vector<300x4xf32>
    %c0_14 = arith.constant 0 : index
    %c0_15 = arith.constant 0 : index
    %15 = vector.load %arg7[%c0_14, %c0_15] : memref<300x1xf32, #tpu.memory_space<vmem>>, vector<300x1xf32>
    %16 = vector.broadcast %15 : vector<300x1xf32> to vector<300x4xf32>
    %17 = arith.addf %14, %16 : vector<300x4xf32>
    %cst_16 = arith.constant 0.000000e+00 : f32
    %18 = vector.broadcast %cst_16 : f32 to vector<300x4xf32>
    %19 = arith.maximumf %17, %18 : vector<300x4xf32>
    %c0_17 = arith.constant 0 : index
    %c0_18 = arith.constant 0 : index
    %20 = vector.load %arg8[%c0_17, %c0_18] : memref<300x1xf32, #tpu.memory_space<vmem>>, vector<300x1xf32>
    %21 = vector.broadcast %20 : vector<300x1xf32> to vector<300x4xf32>
    %22 = arith.mulf %19, %21 : vector<300x4xf32>
    %cst_19 = arith.constant dense<0.000000e+00> : vector<4xf32>
    %23 = vector.multi_reduction <add>, %22, %cst_19 [0] : vector<300x4xf32> to vector<4xf32>
    %24 = vector.shape_cast %23 : vector<4xf32> to vector<1x4xf32>
    %c0_20 = arith.constant 0 : index
    %c0_21 = arith.constant 0 : index
    %25 = vector.load %arg9[%c0_20, %c0_21] : memref<1x1xf32, #tpu.memory_space<vmem>>, vector<1x1xf32>
    %26 = vector.broadcast %25 : vector<1x1xf32> to vector<1x4xf32>
    %27 = arith.addf %24, %26 : vector<1x4xf32>
    %c0_22 = arith.constant 0 : index
    %c0_23 = arith.constant 0 : index
    %28 = vector.load %arg10[%c0_22, %c0_23] : memref<1x4xf32, #tpu.memory_space<vmem>>, vector<1x4xf32>
    tpu.vector_store %arg10[%c0_22, %c0_23], %27 {strides = array<i32>} : memref<1x4xf32, #tpu.memory_space<vmem>>, vector<1x4xf32>,
    return
  }
  func.func @transform_0(%arg0: i32) -> (i32, i32) {
    %c0_i32 = arith.constant 0 : i32
    %c0_i32_0 = arith.constant 0 : i32
    return %c0_i32, %arg0 : i32, i32
  }
  func.func @transform_1(%arg0: i32) -> (i32, i32) {
    %c0_i32 = arith.constant 0 : i32
    %c0_i32_0 = arith.constant 0 : i32
    return %c0_i32, %arg0 : i32, i32
  }
  func.func @transform_2(%arg0: i32) -> (i32, i32) {
    %c0_i32 = arith.constant 0 : i32
    %c0_i32_0 = arith.constant 0 : i32
    %c0_i32_1 = arith.constant 0 : i32
    return %c0_i32, %c0_i32_0 : i32, i32
  }
  func.func @transform_3(%arg0: i32) -> (i32, i32) {
    %c0_i32 = arith.constant 0 : i32
    %c0_i32_0 = arith.constant 0 : i32
    %c0_i32_1 = arith.constant 0 : i32
    return %c0_i32, %c0_i32_0 : i32, i32
  }
  func.func @transform_4(%arg0: i32) -> (i32, i32) {
    %c0_i32 = arith.constant 0 : i32
    %c0_i32_0 = arith.constant 0 : i32
    %c0_i32_1 = arith.constant 0 : i32
    return %c0_i32, %c0_i32_0 : i32, i32
  }
  func.func @transform_5(%arg0: i32) -> (i32, i32) {
    %c0_i32 = arith.constant 0 : i32
    %c0_i32_0 = arith.constant 0 : i32
    %c0_i32_1 = arith.constant 0 : i32
    return %c0_i32, %c0_i32_0 : i32, i32
  }
  func.func @transform_6(%arg0: i32) -> (i32, i32) {
    %c0_i32 = arith.constant 0 : i32
    %c0_i32_0 = arith.constant 0 : i32
    %c0_i32_1 = arith.constant 0 : i32
    return %c0_i32, %c0_i32_0 : i32, i32
  }
  func.func @transform_7(%arg0: i32) -> (i32, i32) {
    %c0_i32 = arith.constant 0 : i32
    %c0_i32_0 = arith.constant 0 : i32
    %c0_i32_1 = arith.constant 0 : i32
    return %c0_i32, %c0_i32_0 : i32, i32
  }
  func.func @transform_8(%arg0: i32) -> (i32, i32) {
    %c0_i32 = arith.constant 0 : i32
    %c0_i32_0 = arith.constant 0 : i32
    %c0_i32_1 = arith.constant 0 : i32
    return %c0_i32, %c0_i32_0 : i32, i32
  }
  func.func @transform_9(%arg0: i32) -> (i32, i32) {
    %c0_i32 = arith.constant 0 : i32
    %c0_i32_0 = arith.constant 0 : i32
    return %c0_i32, %arg0 : i32, i32
  }
}

</mosaic_0001>

<llo_original>
// kernel: dummy_critic_forward.1
$region0: #{dummy_critic_forward.1}
  #allocation0 [shape = 'u32[]', space=smem, size = 0x4, offset = 0x4, fixed_abs, tag = 'smem constant byte address 0x4 - core index']
  #allocation1 [shape = 'u32[144,128]{1,0:T(1,128)}', space=vmem, size = 0x12000, scoped, tag = 'internal scratch']
  #allocation2 [shape = 'f32[1,1]{1,0:T(1,128)S(1)}', space=vmem, size = 0x200, scoped, tag = 'scoped memory for dummy_critic_forward.1']
  %s0 = inlined_call_operand.vmem [shape: bf16[16,4], index: 0, kind: input, shape index: {}]
  %s1 = inlined_call_operand.vmem [shape: bf16[8,4], index: 1, kind: input, shape index: {}]
  %s2 = inlined_call_operand.vmem [shape: bf16[400,16], index: 2, kind: input, shape index: {}]
  %s3 = inlined_call_operand.vmem [shape: bf16[400,8], index: 3, kind: input, shape index: {}]
  %s4 = inlined_call_operand.vmem [shape: f32[400,1], index: 4, kind: input, shape index: {}]
  %s5 = inlined_call_operand.vmem [shape: bf16[300,400], index: 5, kind: input, shape index: {}]
  %s6 = inlined_call_operand.vmem [shape: f32[300,1], index: 6, kind: input, shape index: {}]
  %s7 = inlined_call_operand.vmem [shape: f32[300,1], index: 7, kind: input, shape index: {}]
  %s8 = inlined_call_operand.<no memory space> [shape: f32[1,1], index: 8, kind: input, shape index: {}]
  %s9 = inlined_call_operand.hbm [shape: f32[1,4], index: 9, kind: output, shape index: {}]
  %s10 = sld [smem:[#allocation0]]
  $region46: #{dummy_critic_forward.1} parent=0
    _
  %s12 = ssub.s32 1, %s10
  %s13 = scalar_select 0, %s12, %s10
  %v14 = vstv %s8
  %15 = vst [vmem:[#allocation2] sm:$0x1] %v14
  $region1: #{dummy_critic_forward.1} parent=0
    #allocation3 [shape = 'u8[512]{0}', space=vmem, size = 0x400, scoped, tag = 'output window, operand 0, single buffered']
    #allocation4 [shape = 's32[1]{0}', space=sflag, size = 0x4, scoped, tag = 'scoped memory for dummy_critic_forward.1']
    %16 = vsyncpa [#allocation4], 0
    // Predicated region
    $region2: #{dummy_critic_forward.1} parent=1 // pred_check
      _
    $region3: #{dummy_critic_forward.1} parent=1 // pred_check_branch
      %18 = sbr.rel (0) target = $region5
    $region4: #{dummy_critic_forward.1} parent=1 // pred_region
      _
    $region5: #{dummy_critic_forward.1} parent=1 // pred_fallthru
      _
    // Predicated region
    $region6: #{dummy_critic_forward.1} parent=1 // pred_check
      _
    $region7: #{dummy_critic_forward.1} parent=1 // pred_check_branch
      %20 = sbr.rel (0) target = $region9
    $region8: #{dummy_critic_forward.1} parent=1 // pred_region
      _
    $region9: #{dummy_critic_forward.1} parent=1 // pred_fallthru
      _
    // Predicated region
    $region10: #{dummy_critic_forward.1} parent=1 // pred_check
      _
    $region11: #{dummy_critic_forward.1} parent=1 // pred_check_branch
      %22 = sbr.rel (0) target = $region13
    $region12: #{dummy_critic_forward.1} parent=1 // pred_region
      _
    $region13: #{dummy_critic_forward.1} parent=1 // pred_fallthru
      _
    // Predicated region
    $region14: #{dummy_critic_forward.1} parent=1 // pred_check
      _
    $region15: #{dummy_critic_forward.1} parent=1 // pred_check_branch
      %24 = sbr.rel (0) target = $region17
    $region16: #{dummy_critic_forward.1} parent=1 // pred_region
      _
    $region17: #{dummy_critic_forward.1} parent=1 // pred_fallthru
      _
    // Predicated region
    $region18: #{dummy_critic_forward.1} parent=1 // pred_check
      _
    $region19: #{dummy_critic_forward.1} parent=1 // pred_check_branch
      %26 = sbr.rel (0) target = $region21
    $region20: #{dummy_critic_forward.1} parent=1 // pred_region
      _
    $region21: #{dummy_critic_forward.1} parent=1 // pred_fallthru
      _
    // Predicated region
    $region22: #{dummy_critic_forward.1} parent=1 // pred_check
      _
    $region23: #{dummy_critic_forward.1} parent=1 // pred_check_branch
      %28 = sbr.rel (0) target = $region25
    $region24: #{dummy_critic_forward.1} parent=1 // pred_region
      _
    $region25: #{dummy_critic_forward.1} parent=1 // pred_fallthru
      _
    // Predicated region
    $region26: #{dummy_critic_forward.1} parent=1 // pred_check
      _
    $region27: #{dummy_critic_forward.1} parent=1 // pred_check_branch
      %30 = sbr.rel (0) target = $region29
    $region28: #{dummy_critic_forward.1} parent=1 // pred_region
      _
    $region29: #{dummy_critic_forward.1} parent=1 // pred_fallthru
      _
    // Predicated region
    $region30: #{dummy_critic_forward.1} parent=1 // pred_check
      _
    $region31: #{dummy_critic_forward.1} parent=1 // pred_check_branch
      %32 = sbr.rel (0) target = $region33
    $region32: #{dummy_critic_forward.1} parent=1 // pred_region
      _
    $region33: #{dummy_critic_forward.1} parent=1 // pred_fallthru
      _
    // Predicated region
    $region34: #{dummy_critic_forward.1} parent=1 // pred_check
      _
    $region35: #{dummy_critic_forward.1} parent=1 // pred_check_branch
      %34 = sbr.rel (0) target = $region37
    $region36: #{dummy_critic_forward.1} parent=1 // pred_region
      _
    $region37: #{dummy_critic_forward.1} parent=1 // pred_fallthru
      _
    %v36 = vld [vmem:[%s2] sm:$0xf]
    %v37 = vld [vmem:[%s2 + $0x4] sm:$0xf]
    %v38 = vld [vmem:[%s2 + $0x8] sm:$0xf]
    %v39 = vld [vmem:[%s2 + $0xc] sm:$0xf]
    %v40 = vld [vmem:[%s2 + $0x10] sm:$0xf]
    %v41 = vld [vmem:[%s2 + $0x14] sm:$0xf]
    %v42 = vld [vmem:[%s2 + $0x18] sm:$0xf]
    %v43 = vld [vmem:[%s2 + $0x1c] sm:$0xf]
    %v44 = vld [vmem:[%s2 + $0x20] sm:$0xf]
    %v45 = vld [vmem:[%s2 + $0x24] sm:$0xf]
    %v46 = vld [vmem:[%s2 + $0x28] sm:$0xf]
    %v47 = vld [vmem:[%s2 + $0x2c] sm:$0xf]
    %v48 = vld [vmem:[%s2 + $0x30] sm:$0xf]
    %v49 = vld [vmem:[%s2 + $0x34] sm:$0xf]
    %v50 = vld [vmem:[%s2 + $0x38] sm:$0xf]
    %v51 = vld [vmem:[%s2 + $0x3c] sm:$0xf]
    %v52 = vld [vmem:[%s2 + $0x40] sm:$0xf]
    %v53 = vld [vmem:[%s2 + $0x44] sm:$0xf]
    %v54 = vld [vmem:[%s2 + $0x48] sm:$0xf]
    %v55 = vld [vmem:[%s2 + $0x4c] sm:$0xf]
    %v56 = vld [vmem:[%s2 + $0x50] sm:$0xf]
    %v57 = vld [vmem:[%s2 + $0x54] sm:$0xf]
    %v58 = vld [vmem:[%s2 + $0x58] sm:$0xf]
    %v59 = vld [vmem:[%s2 + $0x5c] sm:$0xf]
    %v60 = vld [vmem:[%s2 + $0x60] sm:$0xf]
    %v61 = vld [vmem:[%s2 + $0x64] sm:$0xf]
    %v62 = vld [vmem:[%s2 + $0x68] sm:$0xf]
    %v63 = vld [vmem:[%s2 + $0x6c] sm:$0xf]
    %v64 = vld [vmem:[%s2 + $0x70] sm:$0xf]
    %v65 = vld [vmem:[%s2 + $0x74] sm:$0xf]
    %v66 = vld [vmem:[%s2 + $0x78] sm:$0xf]
    %v67 = vld [vmem:[%s2 + $0x7c] sm:$0xf]
    %v68 = vld [vmem:[%s2 + $0x80] sm:$0xf]
    %v69 = vld [vmem:[%s2 + $0x84] sm:$0xf]
    %v70 = vld [vmem:[%s2 + $0x88] sm:$0xf]
    %v71 = vld [vmem:[%s2 + $0x8c] sm:$0xf]
    %v72 = vld [vmem:[%s2 + $0x90] sm:$0xf]
    %v73 = vld [vmem:[%s2 + $0x94] sm:$0xf]
    %v74 = vld [vmem:[%s2 + $0x98] sm:$0xf]
    %v75 = vld [vmem:[%s2 + $0x9c] sm:$0xf]
    %v76 = vld [vmem:[%s2 + $0xa0] sm:$0xf]
    %v77 = vld [vmem:[%s2 + $0xa4] sm:$0xf]
    %v78 = vld [vmem:[%s2 + $0xa8] sm:$0xf]
    %v79 = vld [vmem:[%s2 + $0xac] sm:$0xf]
    %v80 = vld [vmem:[%s2 + $0xb0] sm:$0xf]
    %v81 = vld [vmem:[%s2 + $0xb4] sm:$0xf]
    %v82 = vld [vmem:[%s2 + $0xb8] sm:$0xf]
    %v83 = vld [vmem:[%s2 + $0xbc] sm:$0xf]
    %v84 = vld [vmem:[%s2 + $0xc0] sm:$0xf]
    %v85 = vld [vmem:[%s2 + $0xc4] sm:$0xf]
    %v86 = vld [vmem:[%s0] sm:$0xf]
    %v87 = vld [vmem:[%s0 + $0x4] sm:$0xf]
    %v88 = vld [vmem:[%s3] sm:$0xf]
    %v89 = vld [vmem:[%s3 + $0x4] sm:$0xf]
    %v90 = vld [vmem:[%s3 + $0x8] sm:$0xf]
    %v91 = vld [vmem:[%s3 + $0xc] sm:$0xf]
    %v92 = vld [vmem:[%s3 + $0x10] sm:$0xf]
    %v93 = vld [vmem:[%s3 + $0x14] sm:$0xf]
    %v94 = vld [vmem:[%s3 + $0x18] sm:$0xf]
    %v95 = vld [vmem:[%s3 + $0x1c] sm:$0xf]
    %v96 = vld [vmem:[%s3 + $0x20] sm:$0xf]
    %v97 = vld [vmem:[%s3 + $0x24] sm:$0xf]
    %v98 = vld [vmem:[%s3 + $0x28] sm:$0xf]
    %v99 = vld [vmem:[%s3 + $0x2c] sm:$0xf]
    %v100 = vld [vmem:[%s3 + $0x30] sm:$0xf]
    %v101 = vld [vmem:[%s3 + $0x34] sm:$0xf]
    %v102 = vld [vmem:[%s3 + $0x38] sm:$0xf]
    %v103 = vld [vmem:[%s3 + $0x3c] sm:$0xf]
    %v104 = vld [vmem:[%s3 + $0x40] sm:$0xf]
    %v105 = vld [vmem:[%s3 + $0x44] sm:$0xf]
    %v106 = vld [vmem:[%s3 + $0x48] sm:$0xf]
    %v107 = vld [vmem:[%s3 + $0x4c] sm:$0xf]
    %v108 = vld [vmem:[%s3 + $0x50] sm:$0xf]
    %v109 = vld [vmem:[%s3 + $0x54] sm:$0xf]
    %v110 = vld [vmem:[%s3 + $0x58] sm:$0xf]
    %v111 = vld [vmem:[%s3 + $0x5c] sm:$0xf]
    %v112 = vld [vmem:[%s3 + $0x60] sm:$0xf]
    %v113 = vld [vmem:[%s3 + $0x64] sm:$0xf]
    %v114 = vld [vmem:[%s3 + $0x68] sm:$0xf]
    %v115 = vld [vmem:[%s3 + $0x6c] sm:$0xf]
    %v116 = vld [vmem:[%s3 + $0x70] sm:$0xf]
    %v117 = vld [vmem:[%s3 + $0x74] sm:$0xf]
    %v118 = vld [vmem:[%s3 + $0x78] sm:$0xf]
    %v119 = vld [vmem:[%s3 + $0x7c] sm:$0xf]
    %v120 = vld [vmem:[%s3 + $0x80] sm:$0xf]
    %v121 = vld [vmem:[%s3 + $0x84] sm:$0xf]
    %v122 = vld [vmem:[%s3 + $0x88] sm:$0xf]
    %v123 = vld [vmem:[%s3 + $0x8c] sm:$0xf]
    %v124 = vld [vmem:[%s3 + $0x90] sm:$0xf]
    %v125 = vld [vmem:[%s3 + $0x94] sm:$0xf]
    %v126 = vld [vmem:[%s3 + $0x98] sm:$0xf]
    %v127 = vld [vmem:[%s3 + $0x9c] sm:$0xf]
    %v128 = vld [vmem:[%s3 + $0xa0] sm:$0xf]
    %v129 = vld [vmem:[%s3 + $0xa4] sm:$0xf]
    %v130 = vld [vmem:[%s3 + $0xa8] sm:$0xf]
    %v131 = vld [vmem:[%s3 + $0xac] sm:$0xf]
    %v132 = vld [vmem:[%s3 + $0xb0] sm:$0xf]
    %v133 = vld [vmem:[%s3 + $0xb4] sm:$0xf]
    %v134 = vld [vmem:[%s3 + $0xb8] sm:$0xf]
    %v135 = vld [vmem:[%s3 + $0xbc] sm:$0xf]
    %v136 = vld [vmem:[%s3 + $0xc0] sm:$0xf]
    %v137 = vld [vmem:[%s3 + $0xc4] sm:$0xf]
    %v138 = vld [vmem:[%s1] sm:$0xf]
    %v189 = vunpack.c.l.b16 %v88
    %v190 = vunpack.c.l.b16 %v89
    %v191 = vunpack.c.l.b16 %v90
    %v192 = vunpack.c.l.b16 %v91
    %v193 = vunpack.c.l.b16 %v92
    %v194 = vunpack.c.l.b16 %v93
    %v195 = vunpack.c.l.b16 %v94
    %v196 = vunpack.c.l.b16 %v95
    %v197 = vunpack.c.l.b16 %v96
    %v198 = vunpack.c.l.b16 %v97
    %v199 = vunpack.c.l.b16 %v98
    %v200 = vunpack.c.l.b16 %v99
    %v201 = vunpack.c.l.b16 %v100
    %v202 = vunpack.c.l.b16 %v101
    %v203 = vunpack.c.l.b16 %v102
    %v204 = vunpack.c.l.b16 %v103
    %v205 = vunpack.c.l.b16 %v104
    %v206 = vunpack.c.l.b16 %v105
    %v207 = vunpack.c.l.b16 %v106
    %v208 = vunpack.c.l.b16 %v107
    %v209 = vunpack.c.l.b16 %v108
    %v210 = vunpack.c.l.b16 %v109
    %v211 = vunpack.c.l.b16 %v110
    %v212 = vunpack.c.l.b16 %v111
    %v213 = vunpack.c.l.b16 %v112
    %v214 = vunpack.c.l.b16 %v113
    %v215 = vunpack.c.l.b16 %v114
    %v216 = vunpack.c.l.b16 %v115
    %v217 = vunpack.c.l.b16 %v116
    %v218 = vunpack.c.l.b16 %v117
    %v219 = vunpack.c.l.b16 %v118
    %v220 = vunpack.c.l.b16 %v119
    %v221 = vunpack.c.l.b16 %v120
    %v222 = vunpack.c.l.b16 %v121
    %v223 = vunpack.c.l.b16 %v122
    %v224 = vunpack.c.l.b16 %v123
    %v225 = vunpack.c.l.b16 %v124
    %v226 = vunpack.c.l.b16 %v125
    %v227 = vunpack.c.l.b16 %v126
    %v228 = vunpack.c.l.b16 %v127
    %v229 = vunpack.c.l.b16 %v128
    %v230 = vunpack.c.l.b16 %v129
    %v231 = vunpack.c.l.b16 %v130
    %v232 = vunpack.c.l.b16 %v131
    %v233 = vunpack.c.l.b16 %v132
    %v234 = vunpack.c.l.b16 %v133
    %v235 = vunpack.c.l.b16 %v134
    %v236 = vunpack.c.l.b16 %v135
    %v237 = vunpack.c.l.b16 %v136
    %v238 = vunpack.c.l.b16 %v137
    %v239 = vpack.c.b16 %v190, %v189
    %v240 = vpack.c.b16 %v192, %v191
    %v241 = vpack.c.b16 %v194, %v193
    %v242 = vpack.c.b16 %v196, %v195
    %v243 = vpack.c.b16 %v198, %v197
    %v244 = vpack.c.b16 %v200, %v199
    %v245 = vpack.c.b16 %v202, %v201
    %v246 = vpack.c.b16 %v204, %v203
    %v247 = vpack.c.b16 %v206, %v205
    %v248 = vpack.c.b16 %v208, %v207
    %v249 = vpack.c.b16 %v210, %v209
    %v250 = vpack.c.b16 %v212, %v211
    %v251 = vpack.c.b16 %v214, %v213
    %v252 = vpack.c.b16 %v216, %v215
    %v253 = vpack.c.b16 %v218, %v217
    %v254 = vpack.c.b16 %v220, %v219
    %v255 = vpack.c.b16 %v222, %v221
    %v256 = vpack.c.b16 %v224, %v223
    %v257 = vpack.c.b16 %v226, %v225
    %v258 = vpack.c.b16 %v228, %v227
    %v259 = vpack.c.b16 %v230, %v229
    %v260 = vpack.c.b16 %v232, %v231
    %v261 = vpack.c.b16 %v234, %v233
    %v262 = vpack.c.b16 %v236, %v235
    %v263 = vpack.c.b16 %v238, %v237
    %vm264 = vcmask 64512
    %v266 = vsel %vm264, %v239, 0
    %v269 = vsel %vm264, %v240, 0
    %v272 = vsel %vm264, %v241, 0
    %v275 = vsel %vm264, %v242, 0
    %v278 = vsel %vm264, %v243, 0
    %v281 = vsel %vm264, %v244, 0
    %v284 = vsel %vm264, %v245, 0
    %v287 = vsel %vm264, %v246, 0
    %v290 = vsel %vm264, %v247, 0
    %v293 = vsel %vm264, %v248, 0
    %v296 = vsel %vm264, %v249, 0
    %v299 = vsel %vm264, %v250, 0
    %v302 = vsel %vm264, %v251, 0
    %v305 = vsel %vm264, %v252, 0
    %v308 = vsel %vm264, %v253, 0
    %v311 = vsel %vm264, %v254, 0
    %v314 = vsel %vm264, %v255, 0
    %v317 = vsel %vm264, %v256, 0
    %v320 = vsel %vm264, %v257, 0
    %v323 = vsel %vm264, %v258, 0
    %v326 = vsel %vm264, %v259, 0
    %v329 = vsel %vm264, %v260, 0
    %v332 = vsel %vm264, %v261, 0
    %v335 = vsel %vm264, %v262, 0
    %v338 = vsel %vm264, %v263, 0
    %vm340 = vcmask 1043456
    %v342 = vsel %vm340, %v138, 0
    %344 = vmatprep.subr.bf16.mxu0 0
    %345 = vmatpush1.bf16.msra.mxu0 %v342
    %346 = vmatprep.subr.bf16.mxu0 0
    %347 = vmatpush1.bf16.msra.mxu0 0
    %348 = vmatprep.subr.bf16.mxu0 0
    %349 = vmatpush1.bf16.msra.mxu0 0
    %350 = vmatprep.subr.bf16.mxu0 0
    %351 = vmatpush1.bf16.msra.mxu0 0
    %352 = vmatprep.subr.bf16.mxu0 0
    %353 = vmatpush1.bf16.msra.mxu0 0
    %354 = vmatprep.subr.bf16.mxu0 0
    %355 = vmatpush1.bf16.msra.mxu0 0
    %356 = vmatprep.subr.bf16.mxu0 0
    %357 = vmatpush1.bf16.msra.mxu0 0
    %358 = vmatprep.subr.bf16.mxu0 0
    %359 = vmatpush1.bf16.msra.mxu0 0
    %360 = vmatprep.subr.bf16.mxu0 0
    %361 = vmatpush1.bf16.msra.mxu0 0
    %362 = vmatprep.subr.bf16.mxu0 0
    %363 = vmatpush1.bf16.msra.mxu0 0
    %364 = vmatprep.subr.bf16.mxu0 0
    %365 = vmatpush1.bf16.msra.mxu0 0
    %366 = vmatprep.subr.bf16.mxu0 0
    %367 = vmatpush1.bf16.msra.mxu0 0
    %368 = vmatprep.subr.bf16.mxu0 0
    %369 = vmatpush1.bf16.msra.mxu0 0
    %370 = vmatprep.subr.bf16.mxu0 0
    %371 = vmatpush1.bf16.msra.mxu0 0
    %372 = vmatprep.subr.bf16.mxu0 0
    %373 = vmatpush1.bf16.msra.mxu0 0
    %374 = vmatprep.subr.bf16.mxu0 0
    %375 = vmatpush1.bf16.msra.mxu0 0
    %376 = vmatprep.mubr.bf16.mxu0 0
    %377 = vmatmul.mubr.bf16.gmra.mrb[0].mxu0 %v266
    %v378 = vpop.f32.mrb[0].mxu0
    %v379 = vadd.f32 0.0, %v378
    %v380 = vpop.f32.mrb[0].mxu0
    %v381 = vpop.f32.mrb[0].mxu0
    %v382 = vadd.f32 0.0, %v381
    %v383 = vpop.f32.mrb[0].mxu0
    %384 = vmatprep.mubr.bf16.mxu0 0
    %385 = vmatmul.mubr.bf16.gmra.mrb[0].mxu0 %v269
    %v386 = vpop.f32.mrb[0].mxu0
    %v387 = vadd.f32 0.0, %v386
    %v388 = vpop.f32.mrb[0].mxu0
    %v389 = vpop.f32.mrb[0].mxu0
    %v390 = vadd.f32 0.0, %v389
    %v391 = vpop.f32.mrb[0].mxu0
    %392 = vmatprep.mubr.bf16.mxu0 0
    %393 = vmatmul.mubr.bf16.gmra.mrb[0].mxu0 %v272
    %v394 = vpop.f32.mrb[0].mxu0
    %v395 = vadd.f32 0.0, %v394
    %v396 = vpop.f32.mrb[0].mxu0
    %v397 = vpop.f32.mrb[0].mxu0
    %v398 = vadd.f32 0.0, %v397
    %v399 = vpop.f32.mrb[0].mxu0
    %400 = vmatprep.mubr.bf16.mxu0 0
    %401 = vmatmul.mubr.bf16.gmra.mrb[0].mxu0 %v275
    %v402 = vpop.f32.mrb[0].mxu0
    %v403 = vadd.f32 0.0, %v402
    %v404 = vpop.f32.mrb[0].mxu0
    %v405 = vpop.f32.mrb[0].mxu0
    %v406 = vadd.f32 0.0, %v405
    %v407 = vpop.f32.mrb[0].mxu0
    %408 = vmatprep.mubr.bf16.mxu0 0
    %409 = vmatmul.mubr.bf16.gmra.mrb[0].mxu0 %v278
    %v410 = vpop.f32.mrb[0].mxu0
    %v411 = vadd.f32 0.0, %v410
    %v412 = vpop.f32.mrb[0].mxu0
    %v413 = vpop.f32.mrb[0].mxu0
    %v414 = vadd.f32 0.0, %v413
    %v415 = vpop.f32.mrb[0].mxu0
    %416 = vmatprep.mubr.bf16.mxu0 0
    %417 = vmatmul.mubr.bf16.gmra.mrb[0].mxu0 %v281
    %v418 = vpop.f32.mrb[0].mxu0
    %v419 = vadd.f32 0.0, %v418
    %v420 = vpop.f32.mrb[0].mxu0
    %v421 = vpop.f32.mrb[0].mxu0
    %v422 = vadd.f32 0.0, %v421
    %v423 = vpop.f32.mrb[0].mxu0
    %424 = vmatprep.mubr.bf16.mxu0 0
    %425 = vmatmul.mubr.bf16.gmra.mrb[0].mxu0 %v284
    %v426 = vpop.f32.mrb[0].mxu0
    %v427 = vadd.f32 0.0, %v426
    %v428 = vpop.f32.mrb[0].mxu0
    %v429 = vpop.f32.mrb[0].mxu0
    %v430 = vadd.f32 0.0, %v429
    %v431 = vpop.f32.mrb[0].mxu0
    %432 = vmatprep.mubr.bf16.mxu0 0
    %433 = vmatmul.mubr.bf16.gmra.mrb[0].mxu0 %v287
    %v434 = vpop.f32.mrb[0].mxu0
    %v435 = vadd.f32 0.0, %v434
    %v436 = vpop.f32.mrb[0].mxu0
    %v437 = vpop.f32.mrb[0].mxu0
    %v438 = vadd.f32 0.0, %v437
    %v439 = vpop.f32.mrb[0].mxu0
    %440 = vmatprep.mubr.bf16.mxu0 0
    %441 = vmatmul.mubr.bf16.gmra.mrb[0].mxu0 %v290
    %v442 = vpop.f32.mrb[0].mxu0
    %v443 = vadd.f32 0.0, %v442
    %v444 = vpop.f32.mrb[0].mxu0
    %v445 = vpop.f32.mrb[0].mxu0
    %v446 = vadd.f32 0.0, %v445
    %v447 = vpop.f32.mrb[0].mxu0
    %448 = vmatprep.mubr.bf16.mxu0 0
    %449 = vmatmul.mubr.bf16.gmra.mrb[0].mxu0 %v293
    %v450 = vpop.f32.mrb[0].mxu0
    %v451 = vadd.f32 0.0, %v450
    %v452 = vpop.f32.mrb[0].mxu0
    %v453 = vpop.f32.mrb[0].mxu0
    %v454 = vadd.f32 0.0, %v453
    %v455 = vpop.f32.mrb[0].mxu0
    %456 = vmatprep.mubr.bf16.mxu0 0
    %457 = vmatmul.mubr.bf16.gmra.mrb[0].mxu0 %v296
    %v458 = vpop.f32.mrb[0].mxu0
    %v459 = vadd.f32 0.0, %v458
    %v460 = vpop.f32.mrb[0].mxu0
    %v461 = vpop.f32.mrb[0].mxu0
    %v462 = vadd.f32 0.0, %v461
    %v463 = vpop.f32.mrb[0].mxu0
    %464 = vmatprep.mubr.bf16.mxu0 0
    %465 = vmatmul.mubr.bf16.gmra.mrb[0].mxu0 %v299
    %v466 = vpop.f32.mrb[0].mxu0
    %v467 = vadd.f32 0.0, %v466
    %v468 = vpop.f32.mrb[0].mxu0
    %v469 = vpop.f32.mrb[0].mxu0
    %v470 = vadd.f32 0.0, %v469
    %v471 = vpop.f32.mrb[0].mxu0
    %472 = vmatprep.mubr.bf16.mxu0 0
    %473 = vmatmul.mubr.bf16.gmra.mrb[0].mxu0 %v302
    %v474 = vpop.f32.mrb[0].mxu0
    %v475 = vadd.f32 0.0, %v474
    %v476 = vpop.f32.mrb[0].mxu0
    %v477 = vpop.f32.mrb[0].mxu0
    %v478 = vadd.f32 0.0, %v477
    %v479 = vpop.f32.mrb[0].mxu0
    %480 = vmatprep.mubr.bf16.mxu0 0
    %481 = vmatmul.mubr.bf16.gmra.mrb[0].mxu0 %v305
    %v482 = vpop.f32.mrb[0].mxu0
    %v483 = vadd.f32 0.0, %v482
    %v484 = vpop.f32.mrb[0].mxu0
    %v485 = vpop.f32.mrb[0].mxu0
    %v486 = vadd.f32 0.0, %v485
    %v487 = vpop.f32.mrb[0].mxu0
    %488 = vmatprep.mubr.bf16.mxu0 0
    %489 = vmatmul.mubr.bf16.gmra.mrb[0].mxu0 %v308
    %v490 = vpop.f32.mrb[0].mxu0
    %v491 = vadd.f32 0.0, %v490
    %v492 = vpop.f32.mrb[0].mxu0
    %v493 = vpop.f32.mrb[0].mxu0
    %v494 = vadd.f32 0.0, %v493
    %v495 = vpop.f32.mrb[0].mxu0
    %496 = vmatprep.mubr.bf16.mxu0 0
    %497 = vmatmul.mubr.bf16.gmra.mrb[0].mxu0 %v311
    %v498 = vpop.f32.mrb[0].mxu0
    %v499 = vadd.f32 0.0, %v498
    %v500 = vpop.f32.mrb[0].mxu0
    %v501 = vpop.f32.mrb[0].mxu0
    %v502 = vadd.f32 0.0, %v501
    %v503 = vpop.f32.mrb[0].mxu0
    %504 = vmatprep.mubr.bf16.mxu0 0
    %505 = vmatmul.mubr.bf16.gmra.mrb[0].mxu0 %v314
    %v506 = vpop.f32.mrb[0].mxu0
    %v507 = vadd.f32 0.0, %v506
    %v508 = vpop.f32.mrb[0].mxu0
    %v509 = vpop.f32.mrb[0].mxu0
    %v510 = vadd.f32 0.0, %v509
    %v511 = vpop.f32.mrb[0].mxu0
    %512 = vmatprep.mubr.bf16.mxu0 0
    %513 = vmatmul.mubr.bf16.gmra.mrb[0].mxu0 %v317
    %v514 = vpop.f32.mrb[0].mxu0
    %v515 = vadd.f32 0.0, %v514
    %v516 = vpop.f32.mrb[0].mxu0
    %v517 = vpop.f32.mrb[0].mxu0
    %v518 = vadd.f32 0.0, %v517
    %v519 = vpop.f32.mrb[0].mxu0
    %520 = vmatprep.mubr.bf16.mxu0 0
    %521 = vmatmul.mubr.bf16.gmra.mrb[0].mxu0 %v320
    %v522 = vpop.f32.mrb[0].mxu0
    %v523 = vadd.f32 0.0, %v522
    %v524 = vpop.f32.mrb[0].mxu0
    %v525 = vpop.f32.mrb[0].mxu0
    %v526 = vadd.f32 0.0, %v525
    %v527 = vpop.f32.mrb[0].mxu0
    %528 = vmatprep.mubr.bf16.mxu0 0
    %529 = vmatmul.mubr.bf16.gmra.mrb[0].mxu0 %v323
    %v530 = vpop.f32.mrb[0].mxu0
    %v531 = vadd.f32 0.0, %v530
    %v532 = vpop.f32.mrb[0].mxu0
    %v533 = vpop.f32.mrb[0].mxu0
    %v534 = vadd.f32 0.0, %v533
    %v535 = vpop.f32.mrb[0].mxu0
    %536 = vmatprep.mubr.bf16.mxu0 0
    %537 = vmatmul.mubr.bf16.gmra.mrb[0].mxu0 %v326
    %v538 = vpop.f32.mrb[0].mxu0
    %v539 = vadd.f32 0.0, %v538
    %v540 = vpop.f32.mrb[0].mxu0
    %v541 = vpop.f32.mrb[0].mxu0
    %v542 = vadd.f32 0.0, %v541
    %v543 = vpop.f32.mrb[0].mxu0
    %544 = vmatprep.mubr.bf16.mxu0 0
    %545 = vmatmul.mubr.bf16.gmra.mrb[0].mxu0 %v329
    %v546 = vpop.f32.mrb[0].mxu0
    %v547 = vadd.f32 0.0, %v546
    %v548 = vpop.f32.mrb[0].mxu0
    %v549 = vpop.f32.mrb[0].mxu0
    %v550 = vadd.f32 0.0, %v549
    %v551 = vpop.f32.mrb[0].mxu0
    %552 = vmatprep.mubr.bf16.mxu0 0
    %553 = vmatmul.mubr.bf16.gmra.mrb[0].mxu0 %v332
    %v554 = vpop.f32.mrb[0].mxu0
    %v555 = vadd.f32 0.0, %v554
    %v556 = vpop.f32.mrb[0].mxu0
    %v557 = vpop.f32.mrb[0].mxu0
    %v558 = vadd.f32 0.0, %v557
    %v559 = vpop.f32.mrb[0].mxu0
    %560 = vmatprep.mubr.bf16.mxu0 0
    %561 = vmatmul.mubr.bf16.gmra.mrb[0].mxu0 %v335
    %v562 = vpop.f32.mrb[0].mxu0
    %v563 = vadd.f32 0.0, %v562
    %v564 = vpop.f32.mrb[0].mxu0
    %v565 = vpop.f32.mrb[0].mxu0
    %v566 = vadd.f32 0.0, %v565
    %v567 = vpop.f32.mrb[0].mxu0
    %568 = vmatprep.mubr.bf16.mxu0 0
    %569 = vmatmul.mubr.bf16.gmra.mrb[0].mxu0 %v338
    %v570 = vpop.f32.mrb[0].mxu0
    %v571 = vadd.f32 0.0, %v570
    %v572 = vpop.f32.mrb[0].mxu0
    %v573 = vpop.f32.mrb[0].mxu0
    %v574 = vadd.f32 0.0, %v573
    %v575 = vpop.f32.mrb[0].mxu0
    %576 = vdwg.mxu0
    %v627 = vunpack.c.l.b16 %v36
    %v628 = vunpack.c.l.b16 %v37
    %v629 = vunpack.c.l.b16 %v38
    %v630 = vunpack.c.l.b16 %v39
    %v631 = vunpack.c.l.b16 %v40
    %v632 = vunpack.c.l.b16 %v41
    %v633 = vunpack.c.l.b16 %v42
    %v634 = vunpack.c.l.b16 %v43
    %v635 = vunpack.c.l.b16 %v44
    %v636 = vunpack.c.l.b16 %v45
    %v637 = vunpack.c.l.b16 %v46
    %v638 = vunpack.c.l.b16 %v47
    %v639 = vunpack.c.l.b16 %v48
    %v640 = vunpack.c.l.b16 %v49
    %v641 = vunpack.c.l.b16 %v50
    %v642 = vunpack.c.l.b16 %v51
    %v643 = vunpack.c.l.b16 %v52
    %v644 = vunpack.c.l.b16 %v53
    %v645 = vunpack.c.l.b16 %v54
    %v646 = vunpack.c.l.b16 %v55
    %v647 = vunpack.c.l.b16 %v56
    %v648 = vunpack.c.l.b16 %v57
    %v649 = vunpack.c.l.b16 %v58
    %v650 = vunpack.c.l.b16 %v59
    %v651 = vunpack.c.l.b16 %v60
    %v652 = vunpack.c.l.b16 %v61
    %v653 = vunpack.c.l.b16 %v62
    %v654 = vunpack.c.l.b16 %v63
    %v655 = vunpack.c.l.b16 %v64
    %v656 = vunpack.c.l.b16 %v65
    %v657 = vunpack.c.l.b16 %v66
    %v658 = vunpack.c.l.b16 %v67
    %v659 = vunpack.c.l.b16 %v68
    %v660 = vunpack.c.l.b16 %v69
    %v661 = vunpack.c.l.b16 %v70
    %v662 = vunpack.c.l.b16 %v71
    %v663 = vunpack.c.l.b16 %v72
    %v664 = vunpack.c.l.b16 %v73
    %v665 = vunpack.c.l.b16 %v74
    %v666 = vunpack.c.l.b16 %v75
    %v667 = vunpack.c.l.b16 %v76
    %v668 = vunpack.c.l.b16 %v77
    %v669 = vunpack.c.l.b16 %v78
    %v670 = vunpack.c.l.b16 %v79
    %v671 = vunpack.c.l.b16 %v80
    %v672 = vunpack.c.l.b16 %v81
    %v673 = vunpack.c.l.b16 %v82
    %v674 = vunpack.c.l.b16 %v83
    %v675 = vunpack.c.l.b16 %v84
    %v676 = vunpack.c.l.b16 %v85
    %v677 = vpack.c.b16 %v628, %v627
    %v678 = vpack.c.b16 %v630, %v629
    %v679 = vpack.c.b16 %v632, %v631
    %v680 = vpack.c.b16 %v634, %v633
    %v681 = vpack.c.b16 %v636, %v635
    %v682 = vpack.c.b16 %v638, %v637
    %v683 = vpack.c.b16 %v640, %v639
    %v684 = vpack.c.b16 %v642, %v641
    %v685 = vpack.c.b16 %v644, %v643
    %v686 = vpack.c.b16 %v646, %v645
    %v687 = vpack.c.b16 %v648, %v647
    %v688 = vpack.c.b16 %v650, %v649
    %v689 = vpack.c.b16 %v652, %v651
    %v690 = vpack.c.b16 %v654, %v653
    %v691 = vpack.c.b16 %v656, %v655
    %v692 = vpack.c.b16 %v658, %v657
    %v693 = vpack.c.b16 %v660, %v659
    %v694 = vpack.c.b16 %v662, %v661
    %v695 = vpack.c.b16 %v664, %v663
    %v696 = vpack.c.b16 %v666, %v665
    %v697 = vpack.c.b16 %v668, %v667
    %v698 = vpack.c.b16 %v670, %v669
    %v699 = vpack.c.b16 %v672, %v671
    %v700 = vpack.c.b16 %v674, %v673
    %v701 = vpack.c.b16 %v676, %v675
    %v704 = vunpack.c.l.b16 %v86
    %v705 = vunpack.c.l.b16 %v87
    %v706 = vpack.c.b16 %v705, %v704
    %vm708 = vcmask 130048
    %v710 = vsel %vm708, %v677, 0
    %v713 = vsel %vm708, %v678, 0
    %v716 = vsel %vm708, %v679, 0
    %v719 = vsel %vm708, %v680, 0
    %v722 = vsel %vm708, %v681, 0
    %v725 = vsel %vm708, %v682, 0
    %v728 = vsel %vm708, %v683, 0
    %v731 = vsel %vm708, %v684, 0
    %v734 = vsel %vm708, %v685, 0
    %v737 = vsel %vm708, %v686, 0
    %v740 = vsel %vm708, %v687, 0
    %v743 = vsel %vm708, %v688, 0
    %v746 = vsel %vm708, %v689, 0
    %v749 = vsel %vm708, %v690, 0
    %v752 = vsel %vm708, %v691, 0
    %v755 = vsel %vm708, %v692, 0
    %v758 = vsel %vm708, %v693, 0
    %v761 = vsel %vm708, %v694, 0
    %v764 = vsel %vm708, %v695, 0
    %v767 = vsel %vm708, %v696, 0
    %v770 = vsel %vm708, %v697, 0
    %v773 = vsel %vm708, %v698, 0
    %v776 = vsel %vm708, %v699, 0
    %v779 = vsel %vm708, %v700, 0
    %v782 = vsel %vm708, %v701, 0
    %784 = vmatprep.subr.bf16.mxu0 0
    %785 = vmatpush1.bf16.msra.mxu0 %v706
    %786 = vmatprep.subr.bf16.mxu0 0
    %787 = vmatpush1.bf16.msra.mxu0 0
    %788 = vmatprep.subr.bf16.mxu0 0
    %789 = vmatpush1.bf16.msra.mxu0 0
    %790 = vmatprep.subr.bf16.mxu0 0
    %791 = vmatpush1.bf16.msra.mxu0 0
    %792 = vmatprep.subr.bf16.mxu0 0
    %793 = vmatpush1.bf16.msra.mxu0 0
    %794 = vmatprep.subr.bf16.mxu0 0
    %795 = vmatpush1.bf16.msra.mxu0 0
    %796 = vmatprep.subr.bf16.mxu0 0
    %797 = vmatpush1.bf16.msra.mxu0 0
    %798 = vmatprep.subr.bf16.mxu0 0
    %799 = vmatpush1.bf16.msra.mxu0 0
    %800 = vmatprep.subr.bf16.mxu0 0
    %801 = vmatpush1.bf16.msra.mxu0 0
    %802 = vmatprep.subr.bf16.mxu0 0
    %803 = vmatpush1.bf16.msra.mxu0 0
    %804 = vmatprep.subr.bf16.mxu0 0
    %805 = vmatpush1.bf16.msra.mxu0 0
    %806 = vmatprep.subr.bf16.mxu0 0
    %807 = vmatpush1.bf16.msra.mxu0 0
    %808 = vmatprep.subr.bf16.mxu0 0
    %809 = vmatpush1.bf16.msra.mxu0 0
    %810 = vmatprep.subr.bf16.mxu0 0
    %811 = vmatpush1.bf16.msra.mxu0 0
    %812 = vmatprep.subr.bf16.mxu0 0
    %813 = vmatpush1.bf16.msra.mxu0 0
    %814 = vmatprep.subr.bf16.mxu0 0
    %815 = vmatpush1.bf16.msra.mxu0 0
    %816 = vmatprep.mubr.bf16.mxu0 0
    %817 = vmatmul.mubr.bf16.gmra.mrb[0].mxu0 %v710
    %v818 = vpop.f32.mrb[0].mxu0
    %v819 = vadd.f32 %v379, %v818
    %v820 = vpop.f32.mrb[0].mxu0
    %v821 = vpop.f32.mrb[0].mxu0
    %v822 = vadd.f32 %v382, %v821
    %v823 = vpop.f32.mrb[0].mxu0
    %824 = vmatprep.mubr.bf16.mxu0 0
    %825 = vmatmul.mubr.bf16.gmra.mrb[0].mxu0 %v713
    %v826 = vpop.f32.mrb[0].mxu0
    %v827 = vadd.f32 %v387, %v826
    %v828 = vpop.f32.mrb[0].mxu0
    %v829 = vpop.f32.mrb[0].mxu0
    %v830 = vadd.f32 %v390, %v829
    %v831 = vpop.f32.mrb[0].mxu0
    %832 = vmatprep.mubr.bf16.mxu0 0
    %833 = vmatmul.mubr.bf16.gmra.mrb[0].mxu0 %v716
    %v834 = vpop.f32.mrb[0].mxu0
    %v835 = vadd.f32 %v395, %v834
    %v836 = vpop.f32.mrb[0].mxu0
    %v837 = vpop.f32.mrb[0].mxu0
    %v838 = vadd.f32 %v398, %v837
    %v839 = vpop.f32.mrb[0].mxu0
    %840 = vmatprep.mubr.bf16.mxu0 0
    %841 = vmatmul.mubr.bf16.gmra.mrb[0].mxu0 %v719
    %v842 = vpop.f32.mrb[0].mxu0
    %v843 = vadd.f32 %v403, %v842
    %v844 = vpop.f32.mrb[0].mxu0
    %v845 = vpop.f32.mrb[0].mxu0
    %v846 = vadd.f32 %v406, %v845
    %v847 = vpop.f32.mrb[0].mxu0
    %848 = vmatprep.mubr.bf16.mxu0 0
    %849 = vmatmul.mubr.bf16.gmra.mrb[0].mxu0 %v722
    %v850 = vpop.f32.mrb[0].mxu0
    %v851 = vadd.f32 %v411, %v850
    %v852 = vpop.f32.mrb[0].mxu0
    %v853 = vpop.f32.mrb[0].mxu0
    %v854 = vadd.f32 %v414, %v853
    %v855 = vpop.f32.mrb[0].mxu0
    %856 = vmatprep.mubr.bf16.mxu0 0
    %857 = vmatmul.mubr.bf16.gmra.mrb[0].mxu0 %v725
    %v858 = vpop.f32.mrb[0].mxu0
    %v859 = vadd.f32 %v419, %v858
    %v860 = vpop.f32.mrb[0].mxu0
    %v861 = vpop.f32.mrb[0].mxu0
    %v862 = vadd.f32 %v422, %v861
    %v863 = vpop.f32.mrb[0].mxu0
    %864 = vmatprep.mubr.bf16.mxu0 0
    %865 = vmatmul.mubr.bf16.gmra.mrb[0].mxu0 %v728
    %v866 = vpop.f32.mrb[0].mxu0
    %v867 = vadd.f32 %v427, %v866
    %v868 = vpop.f32.mrb[0].mxu0
    %v869 = vpop.f32.mrb[0].mxu0
    %v870 = vadd.f32 %v430, %v869
    %v871 = vpop.f32.mrb[0].mxu0
    %872 = vmatprep.mubr.bf16.mxu0 0
    %873 = vmatmul.mubr.bf16.gmra.mrb[0].mxu0 %v731
    %v874 = vpop.f32.mrb[0].mxu0
    %v875 = vadd.f32 %v435, %v874
    %v876 = vpop.f32.mrb[0].mxu0
    %v877 = vpop.f32.mrb[0].mxu0
    %v878 = vadd.f32 %v438, %v877
    %v879 = vpop.f32.mrb[0].mxu0
    %880 = vmatprep.mubr.bf16.mxu0 0
    %881 = vmatmul.mubr.bf16.gmra.mrb[0].mxu0 %v734
    %v882 = vpop.f32.mrb[0].mxu0
    %v883 = vadd.f32 %v443, %v882
    %v884 = vpop.f32.mrb[0].mxu0
    %v885 = vpop.f32.mrb[0].mxu0
    %v886 = vadd.f32 %v446, %v885
    %v887 = vpop.f32.mrb[0].mxu0
    %888 = vmatprep.mubr.bf16.mxu0 0
    %889 = vmatmul.mubr.bf16.gmra.mrb[0].mxu0 %v737
    %v890 = vpop.f32.mrb[0].mxu0
    %v891 = vadd.f32 %v451, %v890
    %v892 = vpop.f32.mrb[0].mxu0
    %v893 = vpop.f32.mrb[0].mxu0
    %v894 = vadd.f32 %v454, %v893
    %v895 = vpop.f32.mrb[0].mxu0
    %896 = vmatprep.mubr.bf16.mxu0 0
    %897 = vmatmul.mubr.bf16.gmra.mrb[0].mxu0 %v740
    %v898 = vpop.f32.mrb[0].mxu0
    %v899 = vadd.f32 %v459, %v898
    %v900 = vpop.f32.mrb[0].mxu0
    %v901 = vpop.f32.mrb[0].mxu0
    %v902 = vadd.f32 %v462, %v901
    %v903 = vpop.f32.mrb[0].mxu0
    %904 = vmatprep.mubr.bf16.mxu0 0
    %905 = vmatmul.mubr.bf16.gmra.mrb[0].mxu0 %v743
    %v906 = vpop.f32.mrb[0].mxu0
    %v907 = vadd.f32 %v467, %v906
    %v908 = vpop.f32.mrb[0].mxu0
    %v909 = vpop.f32.mrb[0].mxu0
    %v910 = vadd.f32 %v470, %v909
    %v911 = vpop.f32.mrb[0].mxu0
    %912 = vmatprep.mubr.bf16.mxu0 0
    %913 = vmatmul.mubr.bf16.gmra.mrb[0].mxu0 %v746
    %v914 = vpop.f32.mrb[0].mxu0
    %v915 = vadd.f32 %v475, %v914
    %v916 = vpop.f32.mrb[0].mxu0
    %v917 = vpop.f32.mrb[0].mxu0
    %v918 = vadd.f32 %v478, %v917
    %v919 = vpop.f32.mrb[0].mxu0
    %920 = vmatprep.mubr.bf16.mxu0 0
    %921 = vmatmul.mubr.bf16.gmra.mrb[0].mxu0 %v749
    %v922 = vpop.f32.mrb[0].mxu0
    %v923 = vadd.f32 %v483, %v922
    %v924 = vpop.f32.mrb[0].mxu0
    %v925 = vpop.f32.mrb[0].mxu0
    %v926 = vadd.f32 %v486, %v925
    %v927 = vpop.f32.mrb[0].mxu0
    %928 = vmatprep.mubr.bf16.mxu0 0
    %929 = vmatmul.mubr.bf16.gmra.mrb[0].mxu0 %v752
    %v930 = vpop.f32.mrb[0].mxu0
    %v931 = vadd.f32 %v491, %v930
    %v932 = vpop.f32.mrb[0].mxu0
    %v933 = vpop.f32.mrb[0].mxu0
    %v934 = vadd.f32 %v494, %v933
    %v935 = vpop.f32.mrb[0].mxu0
    %936 = vmatprep.mubr.bf16.mxu0 0
    %937 = vmatmul.mubr.bf16.gmra.mrb[0].mxu0 %v755
    %v938 = vpop.f32.mrb[0].mxu0
    %v939 = vadd.f32 %v499, %v938
    %v940 = vpop.f32.mrb[0].mxu0
    %v941 = vpop.f32.mrb[0].mxu0
    %v942 = vadd.f32 %v502, %v941
    %v943 = vpop.f32.mrb[0].mxu0
    %944 = vmatprep.mubr.bf16.mxu0 0
    %945 = vmatmul.mubr.bf16.gmra.mrb[0].mxu0 %v758
    %v946 = vpop.f32.mrb[0].mxu0
    %v947 = vadd.f32 %v507, %v946
    %v948 = vpop.f32.mrb[0].mxu0
    %v949 = vpop.f32.mrb[0].mxu0
    %v950 = vadd.f32 %v510, %v949
    %v951 = vpop.f32.mrb[0].mxu0
    %952 = vmatprep.mubr.bf16.mxu0 0
    %953 = vmatmul.mubr.bf16.gmra.mrb[0].mxu0 %v761
    %v954 = vpop.f32.mrb[0].mxu0
    %v955 = vadd.f32 %v515, %v954
    %v956 = vpop.f32.mrb[0].mxu0
    %v957 = vpop.f32.mrb[0].mxu0
    %v958 = vadd.f32 %v518, %v957
    %v959 = vpop.f32.mrb[0].mxu0
    %960 = vmatprep.mubr.bf16.mxu0 0
    %961 = vmatmul.mubr.bf16.gmra.mrb[0].mxu0 %v764
    %v962 = vpop.f32.mrb[0].mxu0
    %v963 = vadd.f32 %v523, %v962
    %v964 = vpop.f32.mrb[0].mxu0
    %v965 = vpop.f32.mrb[0].mxu0
    %v966 = vadd.f32 %v526, %v965
    %v967 = vpop.f32.mrb[0].mxu0
    %968 = vmatprep.mubr.bf16.mxu0 0
    %969 = vmatmul.mubr.bf16.gmra.mrb[0].mxu0 %v767
    %v970 = vpop.f32.mrb[0].mxu0
    %v971 = vadd.f32 %v531, %v970
    %v972 = vpop.f32.mrb[0].mxu0
    %v973 = vpop.f32.mrb[0].mxu0
    %v974 = vadd.f32 %v534, %v973
    %v975 = vpop.f32.mrb[0].mxu0
    %976 = vmatprep.mubr.bf16.mxu0 0
    %977 = vmatmul.mubr.bf16.gmra.mrb[0].mxu0 %v770
    %v978 = vpop.f32.mrb[0].mxu0
    %v979 = vadd.f32 %v539, %v978
    %v980 = vpop.f32.mrb[0].mxu0
    %v981 = vpop.f32.mrb[0].mxu0
    %v982 = vadd.f32 %v542, %v981
    %v983 = vpop.f32.mrb[0].mxu0
    %984 = vmatprep.mubr.bf16.mxu0 0
    %985 = vmatmul.mubr.bf16.gmra.mrb[0].mxu0 %v773
    %v986 = vpop.f32.mrb[0].mxu0
    %v987 = vadd.f32 %v547, %v986
    %v988 = vpop.f32.mrb[0].mxu0
    %v989 = vpop.f32.mrb[0].mxu0
    %v990 = vadd.f32 %v550, %v989
    %v991 = vpop.f32.mrb[0].mxu0
    %992 = vmatprep.mubr.bf16.mxu0 0
    %993 = vmatmul.mubr.bf16.gmra.mrb[0].mxu0 %v776
    %v994 = vpop.f32.mrb[0].mxu0
    %v995 = vadd.f32 %v555, %v994
    %v996 = vpop.f32.mrb[0].mxu0
    %v997 = vpop.f32.mrb[0].mxu0
    %v998 = vadd.f32 %v558, %v997
    %v999 = vpop.f32.mrb[0].mxu0
    %1000 = vmatprep.mubr.bf16.mxu0 0
    %1001 = vmatmul.mubr.bf16.gmra.mrb[0].mxu0 %v779
    %v1002 = vpop.f32.mrb[0].mxu0
    %v1003 = vadd.f32 %v563, %v1002
    %v1004 = vpop.f32.mrb[0].mxu0
    %v1005 = vpop.f32.mrb[0].mxu0
    %v1006 = vadd.f32 %v566, %v1005
    %v1007 = vpop.f32.mrb[0].mxu0
    %1008 = vmatprep.mubr.bf16.mxu0 0
    %1009 = vmatmul.mubr.bf16.gmra.mrb[0].mxu0 %v782
    %v1010 = vpop.f32.mrb[0].mxu0
    %v1011 = vadd.f32 %v571, %v1010
    %v1012 = vpop.f32.mrb[0].mxu0
    %v1013 = vpop.f32.mrb[0].mxu0
    %v1014 = vadd.f32 %v574, %v1013
    %v1015 = vpop.f32.mrb[0].mxu0
    %1016 = vdwg.mxu0
    %v1017 = vld [vmem:[%s4] sm:$0xff]
    %v1018 = vld [vmem:[%s4 + $0x8] sm:$0xff]
    %v1019 = vld [vmem:[%s4 + $0x10] sm:$0xff]
    %v1020 = vld [vmem:[%s4 + $0x18] sm:$0xff]
    %v1021 = vld [vmem:[%s4 + $0x20] sm:$0xff]
    %v1022 = vld [vmem:[%s4 + $0x28] sm:$0xff]
    %v1023 = vld [vmem:[%s4 + $0x30] sm:$0xff]
    %v1024 = vld [vmem:[%s4 + $0x38] sm:$0xff]
    %v1025 = vld [vmem:[%s4 + $0x40] sm:$0xff]
    %v1026 = vld [vmem:[%s4 + $0x48] sm:$0xff]
    %v1027 = vld [vmem:[%s4 + $0x50] sm:$0xff]
    %v1028 = vld [vmem:[%s4 + $0x58] sm:$0xff]
    %v1029 = vld [vmem:[%s4 + $0x60] sm:$0xff]
    %v1030 = vld [vmem:[%s4 + $0x68] sm:$0xff]
    %v1031 = vld [vmem:[%s4 + $0x70] sm:$0xff]
    %v1032 = vld [vmem:[%s4 + $0x78] sm:$0xff]
    %v1033 = vld [vmem:[%s4 + $0x80] sm:$0xff]
    %v1034 = vld [vmem:[%s4 + $0x88] sm:$0xff]
    %v1035 = vld [vmem:[%s4 + $0x90] sm:$0xff]
    %v1036 = vld [vmem:[%s4 + $0x98] sm:$0xff]
    %v1037 = vld [vmem:[%s4 + $0xa0] sm:$0xff]
    %v1038 = vld [vmem:[%s4 + $0xa8] sm:$0xff]
    %v1039 = vld [vmem:[%s4 + $0xb0] sm:$0xff]
    %v1040 = vld [vmem:[%s4 + $0xb8] sm:$0xff]
    %v1041 = vld [vmem:[%s4 + $0xc0] sm:$0xff]
    %v1042 = vld [vmem:[%s4 + $0xc8] sm:$0xff]
    %v1043 = vld [vmem:[%s4 + $0xd0] sm:$0xff]
    %v1044 = vld [vmem:[%s4 + $0xd8] sm:$0xff]
    %v1045 = vld [vmem:[%s4 + $0xe0] sm:$0xff]
    %v1046 = vld [vmem:[%s4 + $0xe8] sm:$0xff]
    %v1047 = vld [vmem:[%s4 + $0xf0] sm:$0xff]
    %v1048 = vld [vmem:[%s4 + $0xf8] sm:$0xff]
    %v1049 = vld [vmem:[%s4 + $0x100] sm:$0xff]
    %v1050 = vld [vmem:[%s4 + $0x108] sm:$0xff]
    %v1051 = vld [vmem:[%s4 + $0x110] sm:$0xff]
    %v1052 = vld [vmem:[%s4 + $0x118] sm:$0xff]
    %v1053 = vld [vmem:[%s4 + $0x120] sm:$0xff]
    %v1054 = vld [vmem:[%s4 + $0x128] sm:$0xff]
    %v1055 = vld [vmem:[%s4 + $0x130] sm:$0xff]
    %v1056 = vld [vmem:[%s4 + $0x138] sm:$0xff]
    %v1057 = vld [vmem:[%s4 + $0x140] sm:$0xff]
    %v1058 = vld [vmem:[%s4 + $0x148] sm:$0xff]
    %v1059 = vld [vmem:[%s4 + $0x150] sm:$0xff]
    %v1060 = vld [vmem:[%s4 + $0x158] sm:$0xff]
    %v1061 = vld [vmem:[%s4 + $0x160] sm:$0xff]
    %v1062 = vld [vmem:[%s4 + $0x168] sm:$0xff]
    %v1063 = vld [vmem:[%s4 + $0x170] sm:$0xff]
    %v1064 = vld [vmem:[%s4 + $0x178] sm:$0xff]
    %v1065 = vld [vmem:[%s4 + $0x180] sm:$0xff]
    %v1066 = vld [vmem:[%s4 + $0x188] sm:$0xff]
    %1068 = vset.pattern.permute.xlu0 0
    %1069 = vperm.xlu0 %1068, %v1017
    %v1070 = vpop.permute.xlu0 %1069
    %1073 = vset.pattern.permute.xlu0 0
    %1074 = vperm.xlu0 %1073, %v1018
    %v1075 = vpop.permute.xlu0 %1074
    %1078 = vset.pattern.permute.xlu0 0
    %1079 = vperm.xlu0 %1078, %v1019
    %v1080 = vpop.permute.xlu0 %1079
    %1083 = vset.pattern.permute.xlu0 0
    %1084 = vperm.xlu0 %1083, %v1020
    %v1085 = vpop.permute.xlu0 %1084
    %1088 = vset.pattern.permute.xlu0 0
    %1089 = vperm.xlu0 %1088, %v1021
    %v1090 = vpop.permute.xlu0 %1089
    %1093 = vset.pattern.permute.xlu0 0
    %1094 = vperm.xlu0 %1093, %v1022
    %v1095 = vpop.permute.xlu0 %1094
    %1098 = vset.pattern.permute.xlu0 0
    %1099 = vperm.xlu0 %1098, %v1023
    %v1100 = vpop.permute.xlu0 %1099
    %1103 = vset.pattern.permute.xlu0 0
    %1104 = vperm.xlu0 %1103, %v1024
    %v1105 = vpop.permute.xlu0 %1104
    %1108 = vset.pattern.permute.xlu0 0
    %1109 = vperm.xlu0 %1108, %v1025
    %v1110 = vpop.permute.xlu0 %1109
    %1113 = vset.pattern.permute.xlu0 0
    %1114 = vperm.xlu0 %1113, %v1026
    %v1115 = vpop.permute.xlu0 %1114
    %1118 = vset.pattern.permute.xlu0 0
    %1119 = vperm.xlu0 %1118, %v1027
    %v1120 = vpop.permute.xlu0 %1119
    %1123 = vset.pattern.permute.xlu0 0
    %1124 = vperm.xlu0 %1123, %v1028
    %v1125 = vpop.permute.xlu0 %1124
    %1128 = vset.pattern.permute.xlu0 0
    %1129 = vperm.xlu0 %1128, %v1029
    %v1130 = vpop.permute.xlu0 %1129
    %1133 = vset.pattern.permute.xlu0 0
    %1134 = vperm.xlu0 %1133, %v1030
    %v1135 = vpop.permute.xlu0 %1134
    %1138 = vset.pattern.permute.xlu0 0
    %1139 = vperm.xlu0 %1138, %v1031
    %v1140 = vpop.permute.xlu0 %1139
    %1143 = vset.pattern.permute.xlu0 0
    %1144 = vperm.xlu0 %1143, %v1032
    %v1145 = vpop.permute.xlu0 %1144
    %1148 = vset.pattern.permute.xlu0 0
    %1149 = vperm.xlu0 %1148, %v1033
    %v1150 = vpop.permute.xlu0 %1149
    %1153 = vset.pattern.permute.xlu0 0
    %1154 = vperm.xlu0 %1153, %v1034
    %v1155 = vpop.permute.xlu0 %1154
    %1158 = vset.pattern.permute.xlu0 0
    %1159 = vperm.xlu0 %1158, %v1035
    %v1160 = vpop.permute.xlu0 %1159
    %1163 = vset.pattern.permute.xlu0 0
    %1164 = vperm.xlu0 %1163, %v1036
    %v1165 = vpop.permute.xlu0 %1164
    %1168 = vset.pattern.permute.xlu0 0
    %1169 = vperm.xlu0 %1168, %v1037
    %v1170 = vpop.permute.xlu0 %1169
    %1173 = vset.pattern.permute.xlu0 0
    %1174 = vperm.xlu0 %1173, %v1038
    %v1175 = vpop.permute.xlu0 %1174
    %1178 = vset.pattern.permute.xlu0 0
    %1179 = vperm.xlu0 %1178, %v1039
    %v1180 = vpop.permute.xlu0 %1179
    %1183 = vset.pattern.permute.xlu0 0
    %1184 = vperm.xlu0 %1183, %v1040
    %v1185 = vpop.permute.xlu0 %1184
    %1188 = vset.pattern.permute.xlu0 0
    %1189 = vperm.xlu0 %1188, %v1041
    %v1190 = vpop.permute.xlu0 %1189
    %1193 = vset.pattern.permute.xlu0 0
    %1194 = vperm.xlu0 %1193, %v1042
    %v1195 = vpop.permute.xlu0 %1194
    %1198 = vset.pattern.permute.xlu0 0
    %1199 = vperm.xlu0 %1198, %v1043
    %v1200 = vpop.permute.xlu0 %1199
    %1203 = vset.pattern.permute.xlu0 0
    %1204 = vperm.xlu0 %1203, %v1044
    %v1205 = vpop.permute.xlu0 %1204
    %1208 = vset.pattern.permute.xlu0 0
    %1209 = vperm.xlu0 %1208, %v1045
    %v1210 = vpop.permute.xlu0 %1209
    %1213 = vset.pattern.permute.xlu0 0
    %1214 = vperm.xlu0 %1213, %v1046
    %v1215 = vpop.permute.xlu0 %1214
    %1218 = vset.pattern.permute.xlu0 0
    %1219 = vperm.xlu0 %1218, %v1047
    %v1220 = vpop.permute.xlu0 %1219
    %1223 = vset.pattern.permute.xlu0 0
    %1224 = vperm.xlu0 %1223, %v1048
    %v1225 = vpop.permute.xlu0 %1224
    %1228 = vset.pattern.permute.xlu0 0
    %1229 = vperm.xlu0 %1228, %v1049
    %v1230 = vpop.permute.xlu0 %1229
    %1233 = vset.pattern.permute.xlu0 0
    %1234 = vperm.xlu0 %1233, %v1050
    %v1235 = vpop.permute.xlu0 %1234
    %1238 = vset.pattern.permute.xlu0 0
    %1239 = vperm.xlu0 %1238, %v1051
    %v1240 = vpop.permute.xlu0 %1239
    %1243 = vset.pattern.permute.xlu0 0
    %1244 = vperm.xlu0 %1243, %v1052
    %v1245 = vpop.permute.xlu0 %1244
    %1248 = vset.pattern.permute.xlu0 0
    %1249 = vperm.xlu0 %1248, %v1053
    %v1250 = vpop.permute.xlu0 %1249
    %1253 = vset.pattern.permute.xlu0 0
    %1254 = vperm.xlu0 %1253, %v1054
    %v1255 = vpop.permute.xlu0 %1254
    %1258 = vset.pattern.permute.xlu0 0
    %1259 = vperm.xlu0 %1258, %v1055
    %v1260 = vpop.permute.xlu0 %1259
    %1263 = vset.pattern.permute.xlu0 0
    %1264 = vperm.xlu0 %1263, %v1056
    %v1265 = vpop.permute.xlu0 %1264
    %1268 = vset.pattern.permute.xlu0 0
    %1269 = vperm.xlu0 %1268, %v1057
    %v1270 = vpop.permute.xlu0 %1269
    %1273 = vset.pattern.permute.xlu0 0
    %1274 = vperm.xlu0 %1273, %v1058
    %v1275 = vpop.permute.xlu0 %1274
    %1278 = vset.pattern.permute.xlu0 0
    %1279 = vperm.xlu0 %1278, %v1059
    %v1280 = vpop.permute.xlu0 %1279
    %1283 = vset.pattern.permute.xlu0 0
    %1284 = vperm.xlu0 %1283, %v1060
    %v1285 = vpop.permute.xlu0 %1284
    %1288 = vset.pattern.permute.xlu0 0
    %1289 = vperm.xlu0 %1288, %v1061
    %v1290 = vpop.permute.xlu0 %1289
    %1293 = vset.pattern.permute.xlu0 0
    %1294 = vperm.xlu0 %1293, %v1062
    %v1295 = vpop.permute.xlu0 %1294
    %1298 = vset.pattern.permute.xlu0 0
    %1299 = vperm.xlu0 %1298, %v1063
    %v1300 = vpop.permute.xlu0 %1299
    %1303 = vset.pattern.permute.xlu0 0
    %1304 = vperm.xlu0 %1303, %v1064
    %v1305 = vpop.permute.xlu0 %1304
    %1308 = vset.pattern.permute.xlu0 0
    %1309 = vperm.xlu0 %1308, %v1065
    %v1310 = vpop.permute.xlu0 %1309
    %1313 = vset.pattern.permute.xlu0 0
    %1314 = vperm.xlu0 %1313, %v1066
    %v1315 = vpop.permute.xlu0 %1314
    %v1317 = vadd.f32 %v819, %v1070
    %v1318 = vadd.f32 %v822, %v1075
    %v1319 = vadd.f32 %v827, %v1080
    %v1320 = vadd.f32 %v830, %v1085
    %v1321 = vadd.f32 %v835, %v1090
    %v1322 = vadd.f32 %v838, %v1095
    %v1323 = vadd.f32 %v843, %v1100
    %v1324 = vadd.f32 %v846, %v1105
    %v1325 = vadd.f32 %v851, %v1110
    %v1326 = vadd.f32 %v854, %v1115
    %v1327 = vadd.f32 %v859, %v1120
    %v1328 = vadd.f32 %v862, %v1125
    %v1329 = vadd.f32 %v867, %v1130
    %v1330 = vadd.f32 %v870, %v1135
    %v1331 = vadd.f32 %v875, %v1140
    %v1332 = vadd.f32 %v878, %v1145
    %v1333 = vadd.f32 %v883, %v1150
    %v1334 = vadd.f32 %v886, %v1155
    %v1335 = vadd.f32 %v891, %v1160
    %v1336 = vadd.f32 %v894, %v1165
    %v1337 = vadd.f32 %v899, %v1170
    %v1338 = vadd.f32 %v902, %v1175
    %v1339 = vadd.f32 %v907, %v1180
    %v1340 = vadd.f32 %v910, %v1185
    %v1341 = vadd.f32 %v915, %v1190
    %v1342 = vadd.f32 %v918, %v1195
    %v1343 = vadd.f32 %v923, %v1200
    %v1344 = vadd.f32 %v926, %v1205
    %v1345 = vadd.f32 %v931, %v1210
    %v1346 = vadd.f32 %v934, %v1215
    %v1347 = vadd.f32 %v939, %v1220
    %v1348 = vadd.f32 %v942, %v1225
    %v1349 = vadd.f32 %v947, %v1230
    %v1350 = vadd.f32 %v950, %v1235
    %v1351 = vadd.f32 %v955, %v1240
    %v1352 = vadd.f32 %v958, %v1245
    %v1353 = vadd.f32 %v963, %v1250
    %v1354 = vadd.f32 %v966, %v1255
    %v1355 = vadd.f32 %v971, %v1260
    %v1356 = vadd.f32 %v974, %v1265
    %v1357 = vadd.f32 %v979, %v1270
    %v1358 = vadd.f32 %v982, %v1275
    %v1359 = vadd.f32 %v987, %v1280
    %v1360 = vadd.f32 %v990, %v1285
    %v1361 = vadd.f32 %v995, %v1290
    %v1362 = vadd.f32 %v998, %v1295
    %v1363 = vadd.f32 %v1003, %v1300
    %v1364 = vadd.f32 %v1006, %v1305
    %v1365 = vadd.f32 %v1011, %v1310
    %v1366 = vadd.f32 %v1014, %v1315
    %v1367 = vmax.f32 %v1317, 0.0
    %v1368 = vmax.f32 %v1318, 0.0
    %v1369 = vmax.f32 %v1319, 0.0
    %v1370 = vmax.f32 %v1320, 0.0
    %v1371 = vmax.f32 %v1321, 0.0
    %v1372 = vmax.f32 %v1322, 0.0
    %v1373 = vmax.f32 %v1323, 0.0
    %v1374 = vmax.f32 %v1324, 0.0
    %v1375 = vmax.f32 %v1325, 0.0
    %v1376 = vmax.f32 %v1326, 0.0
    %v1377 = vmax.f32 %v1327, 0.0
    %v1378 = vmax.f32 %v1328, 0.0
    %v1379 = vmax.f32 %v1329, 0.0
    %v1380 = vmax.f32 %v1330, 0.0
    %v1381 = vmax.f32 %v1331, 0.0
    %v1382 = vmax.f32 %v1332, 0.0
    %v1383 = vmax.f32 %v1333, 0.0
    %v1384 = vmax.f32 %v1334, 0.0
    %v1385 = vmax.f32 %v1335, 0.0
    %v1386 = vmax.f32 %v1336, 0.0
    %v1387 = vmax.f32 %v1337, 0.0
    %v1388 = vmax.f32 %v1338, 0.0
    %v1389 = vmax.f32 %v1339, 0.0
    %v1390 = vmax.f32 %v1340, 0.0
    %v1391 = vmax.f32 %v1341, 0.0
    %v1392 = vmax.f32 %v1342, 0.0
    %v1393 = vmax.f32 %v1343, 0.0
    %v1394 = vmax.f32 %v1344, 0.0
    %v1395 = vmax.f32 %v1345, 0.0
    %v1396 = vmax.f32 %v1346, 0.0
    %v1397 = vmax.f32 %v1347, 0.0
    %v1398 = vmax.f32 %v1348, 0.0
    %v1399 = vmax.f32 %v1349, 0.0
    %v1400 = vmax.f32 %v1350, 0.0
    %v1401 = vmax.f32 %v1351, 0.0
    %v1402 = vmax.f32 %v1352, 0.0
    %v1403 = vmax.f32 %v1353, 0.0
    %v1404 = vmax.f32 %v1354, 0.0
    %v1405 = vmax.f32 %v1355, 0.0
    %v1406 = vmax.f32 %v1356, 0.0
    %v1407 = vmax.f32 %v1357, 0.0
    %v1408 = vmax.f32 %v1358, 0.0
    %v1409 = vmax.f32 %v1359, 0.0
    %v1410 = vmax.f32 %v1360, 0.0
    %v1411 = vmax.f32 %v1361, 0.0
    %v1412 = vmax.f32 %v1362, 0.0
    %v1413 = vmax.f32 %v1363, 0.0
    %v1414 = vmax.f32 %v1364, 0.0
    %v1415 = vmax.f32 %v1365, 0.0
    %v1416 = vmax.f32 %v1366, 0.0
    %v1417 = vld [vmem:[%s5] sm:$0xff]
    %v1418 = vld [vmem:[%s5 + $0x8] sm:$0xff]
    %v1419 = vld [vmem:[%s5 + $0x10] sm:$0xff]
    %v1420 = vld [vmem:[%s5 + $0x18] sm:$0xff]
    %v1421 = vld [vmem:[%s5 + $0x20] sm:$0xff]
    %v1422 = vld [vmem:[%s5 + $0x28] sm:$0xff]
    %v1423 = vld [vmem:[%s5 + $0x30] sm:$0xff]
    %v1424 = vld [vmem:[%s5 + $0x38] sm:$0xff]
    %v1425 = vld [vmem:[%s5 + $0x40] sm:$0xff]
    %v1426 = vld [vmem:[%s5 + $0x48] sm:$0xff]
    %v1427 = vld [vmem:[%s5 + $0x50] sm:$0xff]
    %v1428 = vld [vmem:[%s5 + $0x58] sm:$0xff]
    %v1429 = vld [vmem:[%s5 + $0x60] sm:$0xff]
    %v1430 = vld [vmem:[%s5 + $0x68] sm:$0xff]
    %v1431 = vld [vmem:[%s5 + $0x70] sm:$0xff]
    %v1432 = vld [vmem:[%s5 + $0x78] sm:$0xff]
    %v1433 = vld [vmem:[%s5 + $0x80] sm:$0xff]
    %v1434 = vld [vmem:[%s5 + $0x88] sm:$0xff]
    %v1435 = vld [vmem:[%s5 + $0x90] sm:$0xff]
    %v1436 = vld [vmem:[%s5 + $0x98] sm:$0xff]
    %v1437 = vld [vmem:[%s5 + $0xa0] sm:$0xff]
    %v1438 = vld [vmem:[%s5 + $0xa8] sm:$0xff]
    %v1439 = vld [vmem:[%s5 + $0xb0] sm:$0xff]
    %v1440 = vld [vmem:[%s5 + $0xb8] sm:$0xff]
    %v1441 = vld [vmem:[%s5 + $0xc0] sm:$0xff]
    %v1442 = vld [vmem:[%s5 + $0xc8] sm:$0xff]
    %v1443 = vld [vmem:[%s5 + $0xd0] sm:$0xff]
    %v1444 = vld [vmem:[%s5 + $0xd8] sm:$0xff]
    %v1445 = vld [vmem:[%s5 + $0xe0] sm:$0xff]
    %v1446 = vld [vmem:[%s5 + $0xe8] sm:$0xff]
    %v1447 = vld [vmem:[%s5 + $0xf0] sm:$0xff]
    %v1448 = vld [vmem:[%s5 + $0xf8] sm:$0xff]
    %v1449 = vld [vmem:[%s5 + $0x100] sm:$0xff]
    %v1450 = vld [vmem:[%s5 + $0x108] sm:$0xff]
    %v1451 = vld [vmem:[%s5 + $0x110] sm:$0xff]
    %v1452 = vld [vmem:[%s5 + $0x118] sm:$0xff]
    %v1453 = vld [vmem:[%s5 + $0x120] sm:$0xff]
    %v1454 = vld [vmem:[%s5 + $0x128] sm:$0xff]
    %v1455 = vld [vmem:[%s5 + $0x130] sm:$0xff]
    %v1456 = vld [vmem:[%s5 + $0x138] sm:$0xff]
    %v1457 = vld [vmem:[%s5 + $0x140] sm:$0xff]
    %v1458 = vld [vmem:[%s5 + $0x148] sm:$0xff]
    %v1459 = vld [vmem:[%s5 + $0x150] sm:$0xff]
    %v1460 = vld [vmem:[%s5 + $0x158] sm:$0xff]
    %v1461 = vld [vmem:[%s5 + $0x160] sm:$0xff]
    %v1462 = vld [vmem:[%s5 + $0x168] sm:$0xff]
    %v1463 = vld [vmem:[%s5 + $0x170] sm:$0xff]
    %v1464 = vld [vmem:[%s5 + $0x178] sm:$0xff]
    %v1465 = vld [vmem:[%s5 + $0x180] sm:$0xff]
    %v1466 = vld [vmem:[%s5 + $0x188] sm:$0xff]
    %v1467 = vld [vmem:[%s5 + $0x190] sm:$0xff]
    %v1468 = vld [vmem:[%s5 + $0x198] sm:$0xff]
    %v1469 = vld [vmem:[%s5 + $0x1a0] sm:$0xff]
    %v1470 = vld [vmem:[%s5 + $0x1a8] sm:$0xff]
    %v1471 = vld [vmem:[%s5 + $0x1b0] sm:$0xff]
    %v1472 = vld [vmem:[%s5 + $0x1b8] sm:$0xff]
    %v1473 = vld [vmem:[%s5 + $0x1c0] sm:$0xff]
    %v1474 = vld [vmem:[%s5 + $0x1c8] sm:$0xff]
    %v1475 = vld [vmem:[%s5 + $0x1d0] sm:$0xff]
    %v1476 = vld [vmem:[%s5 + $0x1d8] sm:$0xff]
    %v1477 = vld [vmem:[%s5 + $0x1e0] sm:$0xff]
    %v1478 = vld [vmem:[%s5 + $0x1e8] sm:$0xff]
    %v1479 = vld [vmem:[%s5 + $0x1f0] sm:$0xff]
    %v1480 = vld [vmem:[%s5 + $0x1f8] sm:$0xff]
    %v1481 = vld [vmem:[%s5 + $0x200] sm:$0xff]
    %v1482 = vld [vmem:[%s5 + $0x208] sm:$0xff]
    %v1483 = vld [vmem:[%s5 + $0x210] sm:$0xff]
    %v1484 = vld [vmem:[%s5 + $0x218] sm:$0xff]
    %v1485 = vld [vmem:[%s5 + $0x220] sm:$0xff]
    %v1486 = vld [vmem:[%s5 + $0x228] sm:$0xff]
    %v1487 = vld [vmem:[%s5 + $0x230] sm:$0xff]
    %v1488 = vld [vmem:[%s5 + $0x238] sm:$0xff]
    %v1489 = vld [vmem:[%s5 + $0x240] sm:$0xff]
    %v1490 = vld [vmem:[%s5 + $0x248] sm:$0xff]
    %v1491 = vld [vmem:[%s5 + $0x250] sm:$0x33]
    %v1492 = vld [vmem:[%s5 + $0x258] sm:$0x33]
    %v1493 = vpack.c.bf16 %v1368, %v1367
    %v1494 = vpack.c.bf16 %v1370, %v1369
    %v1495 = vpack.c.bf16 %v1372, %v1371
    %v1496 = vpack.c.bf16 %v1374, %v1373
    %v1497 = vpack.c.bf16 %v1376, %v1375
    %v1498 = vpack.c.bf16 %v1378, %v1377
    %v1499 = vpack.c.bf16 %v1380, %v1379
    %v1500 = vpack.c.bf16 %v1382, %v1381
    %v1501 = vpack.c.bf16 %v1384, %v1383
    %v1502 = vpack.c.bf16 %v1386, %v1385
    %v1503 = vpack.c.bf16 %v1388, %v1387
    %v1504 = vpack.c.bf16 %v1390, %v1389
    %v1505 = vpack.c.bf16 %v1392, %v1391
    %v1506 = vpack.c.bf16 %v1394, %v1393
    %v1507 = vpack.c.bf16 %v1396, %v1395
    %v1508 = vpack.c.bf16 %v1398, %v1397
    %v1509 = vpack.c.bf16 %v1400, %v1399
    %v1510 = vpack.c.bf16 %v1402, %v1401
    %v1511 = vpack.c.bf16 %v1404, %v1403
    %v1512 = vpack.c.bf16 %v1406, %v1405
    %v1513 = vpack.c.bf16 %v1408, %v1407
    %v1514 = vpack.c.bf16 %v1410, %v1409
    %v1515 = vpack.c.bf16 %v1412, %v1411
    %v1516 = vpack.c.bf16 %v1414, %v1413
    %v1517 = vpack.c.bf16 %v1416, %v1415
    %v1518 = vld [vmem:[%s6] sm:$0xff]
    %v1519 = vld [vmem:[%s6 + $0x8] sm:$0xff]
    %v1520 = vld [vmem:[%s6 + $0x10] sm:$0xff]
    %v1521 = vld [vmem:[%s6 + $0x18] sm:$0xff]
    %v1522 = vld [vmem:[%s6 + $0x20] sm:$0xff]
    %v1523 = vld [vmem:[%s6 + $0x28] sm:$0xff]
    %v1524 = vld [vmem:[%s6 + $0x30] sm:$0xff]
    %v1525 = vld [vmem:[%s6 + $0x38] sm:$0xff]
    %v1526 = vld [vmem:[%s6 + $0x40] sm:$0xff]
    %v1527 = vld [vmem:[%s6 + $0x48] sm:$0xff]
    %v1528 = vld [vmem:[%s6 + $0x50] sm:$0xff]
    %v1529 = vld [vmem:[%s6 + $0x58] sm:$0xff]
    %v1530 = vld [vmem:[%s6 + $0x60] sm:$0xff]
    %v1531 = vld [vmem:[%s6 + $0x68] sm:$0xff]
    %v1532 = vld [vmem:[%s6 + $0x70] sm:$0xff]
    %v1533 = vld [vmem:[%s6 + $0x78] sm:$0xff]
    %v1534 = vld [vmem:[%s6 + $0x80] sm:$0xff]
    %v1535 = vld [vmem:[%s6 + $0x88] sm:$0xff]
    %v1536 = vld [vmem:[%s6 + $0x90] sm:$0xff]
    %v1537 = vld [vmem:[%s6 + $0x98] sm:$0xff]
    %v1538 = vld [vmem:[%s6 + $0xa0] sm:$0xff]
    %v1539 = vld [vmem:[%s6 + $0xa8] sm:$0xff]
    %v1540 = vld [vmem:[%s6 + $0xb0] sm:$0xff]
    %v1541 = vld [vmem:[%s6 + $0xb8] sm:$0xff]
    %v1542 = vld [vmem:[%s6 + $0xc0] sm:$0xff]
    %v1543 = vld [vmem:[%s6 + $0xc8] sm:$0xff]
    %v1544 = vld [vmem:[%s6 + $0xd0] sm:$0xff]
    %v1545 = vld [vmem:[%s6 + $0xd8] sm:$0xff]
    %v1546 = vld [vmem:[%s6 + $0xe0] sm:$0xff]
    %v1547 = vld [vmem:[%s6 + $0xe8] sm:$0xff]
    %v1548 = vld [vmem:[%s6 + $0xf0] sm:$0xff]
    %v1549 = vld [vmem:[%s6 + $0xf8] sm:$0xff]
    %v1550 = vld [vmem:[%s6 + $0x100] sm:$0xff]
    %v1551 = vld [vmem:[%s6 + $0x108] sm:$0xff]
    %v1552 = vld [vmem:[%s6 + $0x110] sm:$0xff]
    %v1553 = vld [vmem:[%s6 + $0x118] sm:$0xff]
    %v1554 = vld [vmem:[%s6 + $0x120] sm:$0xff]
    %v1555 = vld [vmem:[%s6 + $0x128] sm:$0xf]
    %1557 = vset.pattern.permute.xlu0 0
    %1558 = vperm.xlu0 %1557, %v1518
    %v1559 = vpop.permute.xlu0 %1558
    %1562 = vset.pattern.permute.xlu0 0
    %1563 = vperm.xlu0 %1562, %v1519
    %v1564 = vpop.permute.xlu0 %1563
    %1567 = vset.pattern.permute.xlu0 0
    %1568 = vperm.xlu0 %1567, %v1520
    %v1569 = vpop.permute.xlu0 %1568
    %1572 = vset.pattern.permute.xlu0 0
    %1573 = vperm.xlu0 %1572, %v1521
    %v1574 = vpop.permute.xlu0 %1573
    %1577 = vset.pattern.permute.xlu0 0
    %1578 = vperm.xlu0 %1577, %v1522
    %v1579 = vpop.permute.xlu0 %1578
    %1582 = vset.pattern.permute.xlu0 0
    %1583 = vperm.xlu0 %1582, %v1523
    %v1584 = vpop.permute.xlu0 %1583
    %1587 = vset.pattern.permute.xlu0 0
    %1588 = vperm.xlu0 %1587, %v1524
    %v1589 = vpop.permute.xlu0 %1588
    %1592 = vset.pattern.permute.xlu0 0
    %1593 = vperm.xlu0 %1592, %v1525
    %v1594 = vpop.permute.xlu0 %1593
    %1597 = vset.pattern.permute.xlu0 0
    %1598 = vperm.xlu0 %1597, %v1526
    %v1599 = vpop.permute.xlu0 %1598
    %1602 = vset.pattern.permute.xlu0 0
    %1603 = vperm.xlu0 %1602, %v1527
    %v1604 = vpop.permute.xlu0 %1603
    %1607 = vset.pattern.permute.xlu0 0
    %1608 = vperm.xlu0 %1607, %v1528
    %v1609 = vpop.permute.xlu0 %1608
    %1612 = vset.pattern.permute.xlu0 0
    %1613 = vperm.xlu0 %1612, %v1529
    %v1614 = vpop.permute.xlu0 %1613
    %1617 = vset.pattern.permute.xlu0 0
    %1618 = vperm.xlu0 %1617, %v1530
    %v1619 = vpop.permute.xlu0 %1618
    %1622 = vset.pattern.permute.xlu0 0
    %1623 = vperm.xlu0 %1622, %v1531
    %v1624 = vpop.permute.xlu0 %1623
    %1627 = vset.pattern.permute.xlu0 0
    %1628 = vperm.xlu0 %1627, %v1532
    %v1629 = vpop.permute.xlu0 %1628
    %1632 = vset.pattern.permute.xlu0 0
    %1633 = vperm.xlu0 %1632, %v1533
    %v1634 = vpop.permute.xlu0 %1633
    %1637 = vset.pattern.permute.xlu0 0
    %1638 = vperm.xlu0 %1637, %v1534
    %v1639 = vpop.permute.xlu0 %1638
    %1642 = vset.pattern.permute.xlu0 0
    %1643 = vperm.xlu0 %1642, %v1535
    %v1644 = vpop.permute.xlu0 %1643
    %1647 = vset.pattern.permute.xlu0 0
    %1648 = vperm.xlu0 %1647, %v1536
    %v1649 = vpop.permute.xlu0 %1648
    %1652 = vset.pattern.permute.xlu0 0
    %1653 = vperm.xlu0 %1652, %v1537
    %v1654 = vpop.permute.xlu0 %1653
    %1657 = vset.pattern.permute.xlu0 0
    %1658 = vperm.xlu0 %1657, %v1538
    %v1659 = vpop.permute.xlu0 %1658
    %1662 = vset.pattern.permute.xlu0 0
    %1663 = vperm.xlu0 %1662, %v1539
    %v1664 = vpop.permute.xlu0 %1663
    %1667 = vset.pattern.permute.xlu0 0
    %1668 = vperm.xlu0 %1667, %v1540
    %v1669 = vpop.permute.xlu0 %1668
    %1672 = vset.pattern.permute.xlu0 0
    %1673 = vperm.xlu0 %1672, %v1541
    %v1674 = vpop.permute.xlu0 %1673
    %1677 = vset.pattern.permute.xlu0 0
    %1678 = vperm.xlu0 %1677, %v1542
    %v1679 = vpop.permute.xlu0 %1678
    %1682 = vset.pattern.permute.xlu0 0
    %1683 = vperm.xlu0 %1682, %v1543
    %v1684 = vpop.permute.xlu0 %1683
    %1687 = vset.pattern.permute.xlu0 0
    %1688 = vperm.xlu0 %1687, %v1544
    %v1689 = vpop.permute.xlu0 %1688
    %1692 = vset.pattern.permute.xlu0 0
    %1693 = vperm.xlu0 %1692, %v1545
    %v1694 = vpop.permute.xlu0 %1693
    %1697 = vset.pattern.permute.xlu0 0
    %1698 = vperm.xlu0 %1697, %v1546
    %v1699 = vpop.permute.xlu0 %1698
    %1702 = vset.pattern.permute.xlu0 0
    %1703 = vperm.xlu0 %1702, %v1547
    %v1704 = vpop.permute.xlu0 %1703
    %1707 = vset.pattern.permute.xlu0 0
    %1708 = vperm.xlu0 %1707, %v1548
    %v1709 = vpop.permute.xlu0 %1708
    %1712 = vset.pattern.permute.xlu0 0
    %1713 = vperm.xlu0 %1712, %v1549
    %v1714 = vpop.permute.xlu0 %1713
    %1717 = vset.pattern.permute.xlu0 0
    %1718 = vperm.xlu0 %1717, %v1550
    %v1719 = vpop.permute.xlu0 %1718
    %1722 = vset.pattern.permute.xlu0 0
    %1723 = vperm.xlu0 %1722, %v1551
    %v1724 = vpop.permute.xlu0 %1723
    %1727 = vset.pattern.permute.xlu0 0
    %1728 = vperm.xlu0 %1727, %v1552
    %v1729 = vpop.permute.xlu0 %1728
    %1732 = vset.pattern.permute.xlu0 0
    %1733 = vperm.xlu0 %1732, %v1553
    %v1734 = vpop.permute.xlu0 %1733
    %1737 = vset.pattern.permute.xlu0 0
    %1738 = vperm.xlu0 %1737, %v1554
    %v1739 = vpop.permute.xlu0 %1738
    %1742 = vset.pattern.permute.xlu0 0
    %1743 = vperm.xlu0 %1742, %v1555
    %v1744 = vpop.permute.xlu0 %1743
    %v1822 = vunpack.c.l.b16 %v1417
    %v1823 = vunpack.c.h.b16 %v1417
    %v1824 = vunpack.c.l.b16 %v1418
    %v1825 = vunpack.c.h.b16 %v1418
    %v1826 = vunpack.c.l.b16 %v1419
    %v1827 = vunpack.c.h.b16 %v1419
    %v1828 = vunpack.c.l.b16 %v1420
    %v1829 = vunpack.c.h.b16 %v1420
    %v1830 = vunpack.c.l.b16 %v1421
    %v1831 = vunpack.c.h.b16 %v1421
    %v1832 = vunpack.c.l.b16 %v1422
    %v1833 = vunpack.c.h.b16 %v1422
    %v1834 = vunpack.c.l.b16 %v1423
    %v1835 = vunpack.c.h.b16 %v1423
    %v1836 = vunpack.c.l.b16 %v1424
    %v1837 = vunpack.c.h.b16 %v1424
    %v1838 = vunpack.c.l.b16 %v1425
    %v1839 = vunpack.c.h.b16 %v1425
    %v1840 = vunpack.c.l.b16 %v1426
    %v1841 = vunpack.c.h.b16 %v1426
    %v1842 = vunpack.c.l.b16 %v1427
    %v1843 = vunpack.c.h.b16 %v1427
    %v1844 = vunpack.c.l.b16 %v1428
    %v1845 = vunpack.c.h.b16 %v1428
    %v1846 = vunpack.c.l.b16 %v1429
    %v1847 = vunpack.c.h.b16 %v1429
    %v1848 = vunpack.c.l.b16 %v1430
    %v1849 = vunpack.c.h.b16 %v1430
    %v1850 = vunpack.c.l.b16 %v1431
    %v1851 = vunpack.c.h.b16 %v1431
    %v1852 = vunpack.c.l.b16 %v1432
    %v1853 = vunpack.c.h.b16 %v1432
    %v1854 = vunpack.c.l.b16 %v1433
    %v1855 = vunpack.c.h.b16 %v1433
    %v1856 = vunpack.c.l.b16 %v1434
    %v1857 = vunpack.c.h.b16 %v1434
    %v1858 = vunpack.c.l.b16 %v1435
    %v1859 = vunpack.c.h.b16 %v1435
    %v1860 = vunpack.c.l.b16 %v1436
    %v1861 = vunpack.c.h.b16 %v1436
    %v1862 = vunpack.c.l.b16 %v1437
    %v1863 = vunpack.c.h.b16 %v1437
    %v1864 = vunpack.c.l.b16 %v1438
    %v1865 = vunpack.c.h.b16 %v1438
    %v1866 = vunpack.c.l.b16 %v1439
    %v1867 = vunpack.c.h.b16 %v1439
    %v1868 = vunpack.c.l.b16 %v1440
    %v1869 = vunpack.c.h.b16 %v1440
    %v1870 = vunpack.c.l.b16 %v1441
    %v1871 = vunpack.c.h.b16 %v1441
    %v1872 = vunpack.c.l.b16 %v1442
    %v1873 = vunpack.c.h.b16 %v1442
    %v1874 = vunpack.c.l.b16 %v1443
    %v1875 = vunpack.c.h.b16 %v1443
    %v1876 = vunpack.c.l.b16 %v1444
    %v1877 = vunpack.c.h.b16 %v1444
    %v1878 = vunpack.c.l.b16 %v1445
    %v1879 = vunpack.c.h.b16 %v1445
    %v1880 = vunpack.c.l.b16 %v1446
    %v1881 = vunpack.c.h.b16 %v1446
    %v1882 = vunpack.c.l.b16 %v1447
    %v1883 = vunpack.c.h.b16 %v1447
    %v1884 = vunpack.c.l.b16 %v1448
    %v1885 = vunpack.c.h.b16 %v1448
    %v1886 = vunpack.c.l.b16 %v1449
    %v1887 = vunpack.c.h.b16 %v1449
    %v1888 = vunpack.c.l.b16 %v1450
    %v1889 = vunpack.c.h.b16 %v1450
    %v1890 = vunpack.c.l.b16 %v1451
    %v1891 = vunpack.c.h.b16 %v1451
    %v1892 = vunpack.c.l.b16 %v1452
    %v1893 = vunpack.c.h.b16 %v1452
    %v1894 = vunpack.c.l.b16 %v1453
    %v1895 = vunpack.c.h.b16 %v1453
    %v1896 = vunpack.c.l.b16 %v1454
    %v1897 = vunpack.c.h.b16 %v1454
    %v1898 = vunpack.c.l.b16 %v1455
    %v1899 = vunpack.c.h.b16 %v1455
    %v1900 = vunpack.c.l.b16 %v1456
    %v1901 = vunpack.c.h.b16 %v1456
    %v1902 = vunpack.c.l.b16 %v1457
    %v1903 = vunpack.c.h.b16 %v1457
    %v1904 = vunpack.c.l.b16 %v1458
    %v1905 = vunpack.c.h.b16 %v1458
    %v1906 = vunpack.c.l.b16 %v1459
    %v1907 = vunpack.c.h.b16 %v1459
    %v1908 = vunpack.c.l.b16 %v1460
    %v1909 = vunpack.c.h.b16 %v1460
    %v1910 = vunpack.c.l.b16 %v1461
    %v1911 = vunpack.c.h.b16 %v1461
    %v1912 = vunpack.c.l.b16 %v1462
    %v1913 = vunpack.c.h.b16 %v1462
    %v1914 = vunpack.c.l.b16 %v1463
    %v1915 = vunpack.c.h.b16 %v1463
    %v1916 = vunpack.c.l.b16 %v1464
    %v1917 = vunpack.c.h.b16 %v1464
    %v1918 = vunpack.c.l.b16 %v1465
    %v1919 = vunpack.c.h.b16 %v1465
    %v1920 = vunpack.c.l.b16 %v1466
    %v1921 = vunpack.c.h.b16 %v1466
    %v1922 = vunpack.c.l.b16 %v1467
    %v1923 = vunpack.c.h.b16 %v1467
    %v1924 = vunpack.c.l.b16 %v1468
    %v1925 = vunpack.c.h.b16 %v1468
    %v1926 = vunpack.c.l.b16 %v1469
    %v1927 = vunpack.c.h.b16 %v1469
    %v1928 = vunpack.c.l.b16 %v1470
    %v1929 = vunpack.c.h.b16 %v1470
    %v1930 = vunpack.c.l.b16 %v1471
    %v1931 = vunpack.c.h.b16 %v1471
    %v1932 = vunpack.c.l.b16 %v1472
    %v1933 = vunpack.c.h.b16 %v1472
    %v1934 = vunpack.c.l.b16 %v1473
    %v1935 = vunpack.c.h.b16 %v1473
    %v1936 = vunpack.c.l.b16 %v1474
    %v1937 = vunpack.c.h.b16 %v1474
    %v1938 = vunpack.c.l.b16 %v1475
    %v1939 = vunpack.c.h.b16 %v1475
    %v1940 = vunpack.c.l.b16 %v1476
    %v1941 = vunpack.c.h.b16 %v1476
    %v1942 = vunpack.c.l.b16 %v1477
    %v1943 = vunpack.c.h.b16 %v1477
    %v1944 = vunpack.c.l.b16 %v1478
    %v1945 = vunpack.c.h.b16 %v1478
    %v1946 = vunpack.c.l.b16 %v1479
    %v1947 = vunpack.c.h.b16 %v1479
    %v1948 = vunpack.c.l.b16 %v1480
    %v1949 = vunpack.c.h.b16 %v1480
    %v1950 = vunpack.c.l.b16 %v1481
    %v1951 = vunpack.c.h.b16 %v1481
    %v1952 = vunpack.c.l.b16 %v1482
    %v1953 = vunpack.c.h.b16 %v1482
    %v1954 = vunpack.c.l.b16 %v1483
    %v1955 = vunpack.c.h.b16 %v1483
    %v1956 = vunpack.c.l.b16 %v1484
    %v1957 = vunpack.c.h.b16 %v1484
    %v1958 = vunpack.c.l.b16 %v1485
    %v1959 = vunpack.c.h.b16 %v1485
    %v1960 = vunpack.c.l.b16 %v1486
    %v1961 = vunpack.c.h.b16 %v1486
    %v1962 = vunpack.c.l.b16 %v1487
    %v1963 = vunpack.c.h.b16 %v1487
    %v1964 = vunpack.c.l.b16 %v1488
    %v1965 = vunpack.c.h.b16 %v1488
    %v1966 = vunpack.c.l.b16 %v1489
    %v1967 = vunpack.c.h.b16 %v1489
    %v1968 = vunpack.c.l.b16 %v1490
    %v1969 = vunpack.c.h.b16 %v1490
    %v1970 = vunpack.c.l.b16 %v1491
    %v1971 = vunpack.c.h.b16 %v1491
    %v1972 = vunpack.c.l.b16 %v1492
    %v1973 = vunpack.c.h.b16 %v1492
    %v1974 = vpack.c.b16 %v1826, %v1822
    %v1975 = vpack.c.b16 %v1827, %v1823
    %v1976 = vpack.c.b16 %v1828, %v1824
    %v1977 = vpack.c.b16 %v1829, %v1825
    %v1978 = vpack.c.b16 %v1834, %v1830
    %v1979 = vpack.c.b16 %v1835, %v1831
    %v1980 = vpack.c.b16 %v1836, %v1832
    %v1981 = vpack.c.b16 %v1837, %v1833
    %v1982 = vpack.c.b16 %v1842, %v1838
    %v1983 = vpack.c.b16 %v1843, %v1839
    %v1984 = vpack.c.b16 %v1844, %v1840
    %v1985 = vpack.c.b16 %v1845, %v1841
    %v1986 = vpack.c.b16 %v1850, %v1846
    %v1987 = vpack.c.b16 %v1851, %v1847
    %v1988 = vpack.c.b16 %v1852, %v1848
    %v1989 = vpack.c.b16 %v1853, %v1849
    %v1990 = vpack.c.b16 %v1858, %v1854
    %v1991 = vpack.c.b16 %v1859, %v1855
    %v1992 = vpack.c.b16 %v1860, %v1856
    %v1993 = vpack.c.b16 %v1861, %v1857
    %v1994 = vpack.c.b16 %v1866, %v1862
    %v1995 = vpack.c.b16 %v1867, %v1863
    %v1996 = vpack.c.b16 %v1868, %v1864
    %v1997 = vpack.c.b16 %v1869, %v1865
    %v1998 = vpack.c.b16 %v1874, %v1870
    %v1999 = vpack.c.b16 %v1875, %v1871
    %v2000 = vpack.c.b16 %v1876, %v1872
    %v2001 = vpack.c.b16 %v1877, %v1873
    %v2002 = vpack.c.b16 %v1882, %v1878
    %v2003 = vpack.c.b16 %v1883, %v1879
    %v2004 = vpack.c.b16 %v1884, %v1880
    %v2005 = vpack.c.b16 %v1885, %v1881
    %v2006 = vpack.c.b16 %v1890, %v1886
    %v2007 = vpack.c.b16 %v1891, %v1887
    %v2008 = vpack.c.b16 %v1892, %v1888
    %v2009 = vpack.c.b16 %v1893, %v1889
    %v2010 = vpack.c.b16 %v1898, %v1894
    %v2011 = vpack.c.b16 %v1899, %v1895
    %v2012 = vpack.c.b16 %v1900, %v1896
    %v2013 = vpack.c.b16 %v1901, %v1897
    %v2014 = vpack.c.b16 %v1906, %v1902
    %v2015 = vpack.c.b16 %v1907, %v1903
    %v2016 = vpack.c.b16 %v1908, %v1904
    %v2017 = vpack.c.b16 %v1909, %v1905
    %v2018 = vpack.c.b16 %v1914, %v1910
    %v2019 = vpack.c.b16 %v1915, %v1911
    %v2020 = vpack.c.b16 %v1916, %v1912
    %v2021 = vpack.c.b16 %v1917, %v1913
    %v2022 = vpack.c.b16 %v1922, %v1918
    %v2023 = vpack.c.b16 %v1923, %v1919
    %v2024 = vpack.c.b16 %v1924, %v1920
    %v2025 = vpack.c.b16 %v1925, %v1921
    %v2026 = vpack.c.b16 %v1930, %v1926
    %v2027 = vpack.c.b16 %v1931, %v1927
    %v2028 = vpack.c.b16 %v1932, %v1928
    %v2029 = vpack.c.b16 %v1933, %v1929
    %v2030 = vpack.c.b16 %v1938, %v1934
    %v2031 = vpack.c.b16 %v1939, %v1935
    %v2032 = vpack.c.b16 %v1940, %v1936
    %v2033 = vpack.c.b16 %v1941, %v1937
    %v2034 = vpack.c.b16 %v1946, %v1942
    %v2035 = vpack.c.b16 %v1947, %v1943
    %v2036 = vpack.c.b16 %v1948, %v1944
    %v2037 = vpack.c.b16 %v1949, %v1945
    %v2038 = vpack.c.b16 %v1954, %v1950
    %v2039 = vpack.c.b16 %v1955, %v1951
    %v2040 = vpack.c.b16 %v1956, %v1952
    %v2041 = vpack.c.b16 %v1957, %v1953
    %v2042 = vpack.c.b16 %v1962, %v1958
    %v2043 = vpack.c.b16 %v1963, %v1959
    %v2044 = vpack.c.b16 %v1964, %v1960
    %v2045 = vpack.c.b16 %v1965, %v1961
    %v2046 = vpack.c.b16 %v1970, %v1966
    %v2047 = vpack.c.b16 %v1971, %v1967
    %v2048 = vpack.c.b16 %v1972, %v1968
    %v2049 = vpack.c.b16 %v1973, %v1969
    %v2108 = vsel %vm708, %v1977, 0
    %v2111 = vsel %vm708, %v1981, 0
    %v2114 = vsel %vm708, %v1985, 0
    %v2117 = vsel %vm708, %v1989, 0
    %v2120 = vsel %vm708, %v1993, 0
    %v2123 = vsel %vm708, %v1997, 0
    %v2126 = vsel %vm708, %v2001, 0
    %v2129 = vsel %vm708, %v2005, 0
    %v2132 = vsel %vm708, %v2009, 0
    %v2135 = vsel %vm708, %v2013, 0
    %v2138 = vsel %vm708, %v2017, 0
    %v2141 = vsel %vm708, %v2021, 0
    %v2144 = vsel %vm708, %v2025, 0
    %v2147 = vsel %vm708, %v2029, 0
    %v2150 = vsel %vm708, %v2033, 0
    %v2153 = vsel %vm708, %v2037, 0
    %v2156 = vsel %vm708, %v2041, 0
    %v2159 = vsel %vm708, %v2045, 0
    %v2162 = vsel %vm708, %v2049, 0
    %2164 = vmatprep.subr.bf16.mxu0 0
    %2165 = vmatpush1.bf16.msra.mxu0 %v1493
    %2166 = vmatprep.subr.bf16.mxu0 0
    %2167 = vmatpush1.bf16.msra.mxu0 %v1494
    %2168 = vmatprep.subr.bf16.mxu0 0
    %2169 = vmatpush1.bf16.msra.mxu0 %v1495
    %2170 = vmatprep.subr.bf16.mxu0 0
    %2171 = vmatpush1.bf16.msra.mxu0 %v1496
    %2172 = vmatprep.subr.bf16.mxu0 0
    %2173 = vmatpush1.bf16.msra.mxu0 %v1497
    %2174 = vmatprep.subr.bf16.mxu0 0
    %2175 = vmatpush1.bf16.msra.mxu0 %v1498
    %2176 = vmatprep.subr.bf16.mxu0 0
    %2177 = vmatpush1.bf16.msra.mxu0 %v1499
    %2178 = vmatprep.subr.bf16.mxu0 0
    %2179 = vmatpush1.bf16.msra.mxu0 %v1500
    %2180 = vmatprep.subr.bf16.mxu0 0
    %2181 = vmatpush1.bf16.msra.mxu0 %v1501
    %2182 = vmatprep.subr.bf16.mxu0 0
    %2183 = vmatpush1.bf16.msra.mxu0 %v1502
    %2184 = vmatprep.subr.bf16.mxu0 0
    %2185 = vmatpush1.bf16.msra.mxu0 %v1503
    %2186 = vmatprep.subr.bf16.mxu0 0
    %2187 = vmatpush1.bf16.msra.mxu0 %v1504
    %2188 = vmatprep.subr.bf16.mxu0 0
    %2189 = vmatpush1.bf16.msra.mxu0 %v1505
    %2190 = vmatprep.subr.bf16.mxu0 0
    %2191 = vmatpush1.bf16.msra.mxu0 %v1506
    %2192 = vmatprep.subr.bf16.mxu0 0
    %2193 = vmatpush1.bf16.msra.mxu0 %v1507
    %2194 = vmatprep.subr.bf16.mxu0 0
    %2195 = vmatpush1.bf16.msra.mxu0 %v1508
    %2196 = vmatprep.mubr.bf16.mxu0 %v1975
    %2197 = vmatmul.mubr.bf16.gmra.mrb[0].mxu0 %v1974
    %v2198 = vpop.f32.mrb[0].mxu0
    %v2199 = vadd.f32 %v1559, %v2198
    %v2200 = vpop.f32.mrb[0].mxu0
    %v2201 = vpop.f32.mrb[0].mxu0
    %v2202 = vadd.f32 %v1564, %v2201
    %v2203 = vpop.f32.mrb[0].mxu0
    %2204 = vmatprep.mubr.bf16.mxu0 %v1979
    %2205 = vmatmul.mubr.bf16.gmra.mrb[0].mxu0 %v1978
    %v2206 = vpop.f32.mrb[0].mxu0
    %v2207 = vadd.f32 %v1569, %v2206
    %v2208 = vpop.f32.mrb[0].mxu0
    %v2209 = vpop.f32.mrb[0].mxu0
    %v2210 = vadd.f32 %v1574, %v2209
    %v2211 = vpop.f32.mrb[0].mxu0
    %2212 = vmatprep.mubr.bf16.mxu0 %v1983
    %2213 = vmatmul.mubr.bf16.gmra.mrb[0].mxu0 %v1982
    %v2214 = vpop.f32.mrb[0].mxu0
    %v2215 = vadd.f32 %v1579, %v2214
    %v2216 = vpop.f32.mrb[0].mxu0
    %v2217 = vpop.f32.mrb[0].mxu0
    %v2218 = vadd.f32 %v1584, %v2217
    %v2219 = vpop.f32.mrb[0].mxu0
    %2220 = vmatprep.mubr.bf16.mxu0 %v1987
    %2221 = vmatmul.mubr.bf16.gmra.mrb[0].mxu0 %v1986
    %v2222 = vpop.f32.mrb[0].mxu0
    %v2223 = vadd.f32 %v1589, %v2222
    %v2224 = vpop.f32.mrb[0].mxu0
    %v2225 = vpop.f32.mrb[0].mxu0
    %v2226 = vadd.f32 %v1594, %v2225
    %v2227 = vpop.f32.mrb[0].mxu0
    %2228 = vmatprep.mubr.bf16.mxu0 %v1991
    %2229 = vmatmul.mubr.bf16.gmra.mrb[0].mxu0 %v1990
    %v2230 = vpop.f32.mrb[0].mxu0
    %v2231 = vadd.f32 %v1599, %v2230
    %v2232 = vpop.f32.mrb[0].mxu0
    %v2233 = vpop.f32.mrb[0].mxu0
    %v2234 = vadd.f32 %v1604, %v2233
    %v2235 = vpop.f32.mrb[0].mxu0
    %2236 = vmatprep.mubr.bf16.mxu0 %v1995
    %2237 = vmatmul.mubr.bf16.gmra.mrb[0].mxu0 %v1994
    %v2238 = vpop.f32.mrb[0].mxu0
    %v2239 = vadd.f32 %v1609, %v2238
    %v2240 = vpop.f32.mrb[0].mxu0
    %v2241 = vpop.f32.mrb[0].mxu0
    %v2242 = vadd.f32 %v1614, %v2241
    %v2243 = vpop.f32.mrb[0].mxu0
    %2244 = vmatprep.mubr.bf16.mxu0 %v1999
    %2245 = vmatmul.mubr.bf16.gmra.mrb[0].mxu0 %v1998
    %v2246 = vpop.f32.mrb[0].mxu0
    %v2247 = vadd.f32 %v1619, %v2246
    %v2248 = vpop.f32.mrb[0].mxu0
    %v2249 = vpop.f32.mrb[0].mxu0
    %v2250 = vadd.f32 %v1624, %v2249
    %v2251 = vpop.f32.mrb[0].mxu0
    %2252 = vmatprep.mubr.bf16.mxu0 %v2003
    %2253 = vmatmul.mubr.bf16.gmra.mrb[0].mxu0 %v2002
    %v2254 = vpop.f32.mrb[0].mxu0
    %v2255 = vadd.f32 %v1629, %v2254
    %v2256 = vpop.f32.mrb[0].mxu0
    %v2257 = vpop.f32.mrb[0].mxu0
    %v2258 = vadd.f32 %v1634, %v2257
    %v2259 = vpop.f32.mrb[0].mxu0
    %2260 = vmatprep.mubr.bf16.mxu0 %v2007
    %2261 = vmatmul.mubr.bf16.gmra.mrb[0].mxu0 %v2006
    %v2262 = vpop.f32.mrb[0].mxu0
    %v2263 = vadd.f32 %v1639, %v2262
    %v2264 = vpop.f32.mrb[0].mxu0
    %v2265 = vpop.f32.mrb[0].mxu0
    %v2266 = vadd.f32 %v1644, %v2265
    %v2267 = vpop.f32.mrb[0].mxu0
    %2268 = vmatprep.mubr.bf16.mxu0 %v2011
    %2269 = vmatmul.mubr.bf16.gmra.mrb[0].mxu0 %v2010
    %v2270 = vpop.f32.mrb[0].mxu0
    %v2271 = vadd.f32 %v1649, %v2270
    %v2272 = vpop.f32.mrb[0].mxu0
    %v2273 = vpop.f32.mrb[0].mxu0
    %v2274 = vadd.f32 %v1654, %v2273
    %v2275 = vpop.f32.mrb[0].mxu0
    %2276 = vmatprep.mubr.bf16.mxu0 %v2015
    %2277 = vmatmul.mubr.bf16.gmra.mrb[0].mxu0 %v2014
    %v2278 = vpop.f32.mrb[0].mxu0
    %v2279 = vadd.f32 %v1659, %v2278
    %v2280 = vpop.f32.mrb[0].mxu0
    %v2281 = vpop.f32.mrb[0].mxu0
    %v2282 = vadd.f32 %v1664, %v2281
    %v2283 = vpop.f32.mrb[0].mxu0
    %2284 = vmatprep.mubr.bf16.mxu0 %v2019
    %2285 = vmatmul.mubr.bf16.gmra.mrb[0].mxu0 %v2018
    %v2286 = vpop.f32.mrb[0].mxu0
    %v2287 = vadd.f32 %v1669, %v2286
    %v2288 = vpop.f32.mrb[0].mxu0
    %v2289 = vpop.f32.mrb[0].mxu0
    %v2290 = vadd.f32 %v1674, %v2289
    %v2291 = vpop.f32.mrb[0].mxu0
    %2292 = vmatprep.mubr.bf16.mxu0 %v2023
    %2293 = vmatmul.mubr.bf16.gmra.mrb[0].mxu0 %v2022
    %v2294 = vpop.f32.mrb[0].mxu0
    %v2295 = vadd.f32 %v1679, %v2294
    %v2296 = vpop.f32.mrb[0].mxu0
    %v2297 = vpop.f32.mrb[0].mxu0
    %v2298 = vadd.f32 %v1684, %v2297
    %v2299 = vpop.f32.mrb[0].mxu0
    %2300 = vmatprep.mubr.bf16.mxu0 %v2027
    %2301 = vmatmul.mubr.bf16.gmra.mrb[0].mxu0 %v2026
    %v2302 = vpop.f32.mrb[0].mxu0
    %v2303 = vadd.f32 %v1689, %v2302
    %v2304 = vpop.f32.mrb[0].mxu0
    %v2305 = vpop.f32.mrb[0].mxu0
    %v2306 = vadd.f32 %v1694, %v2305
    %v2307 = vpop.f32.mrb[0].mxu0
    %2308 = vmatprep.mubr.bf16.mxu0 %v2031
    %2309 = vmatmul.mubr.bf16.gmra.mrb[0].mxu0 %v2030
    %v2310 = vpop.f32.mrb[0].mxu0
    %v2311 = vadd.f32 %v1699, %v2310
    %v2312 = vpop.f32.mrb[0].mxu0
    %v2313 = vpop.f32.mrb[0].mxu0
    %v2314 = vadd.f32 %v1704, %v2313
    %v2315 = vpop.f32.mrb[0].mxu0
    %2316 = vmatprep.mubr.bf16.mxu0 %v2035
    %2317 = vmatmul.mubr.bf16.gmra.mrb[0].mxu0 %v2034
    %v2318 = vpop.f32.mrb[0].mxu0
    %v2319 = vadd.f32 %v1709, %v2318
    %v2320 = vpop.f32.mrb[0].mxu0
    %v2321 = vpop.f32.mrb[0].mxu0
    %v2322 = vadd.f32 %v1714, %v2321
    %v2323 = vpop.f32.mrb[0].mxu0
    %2324 = vmatprep.mubr.bf16.mxu0 %v2039
    %2325 = vmatmul.mubr.bf16.gmra.mrb[0].mxu0 %v2038
    %v2326 = vpop.f32.mrb[0].mxu0
    %v2327 = vadd.f32 %v1719, %v2326
    %v2328 = vpop.f32.mrb[0].mxu0
    %v2329 = vpop.f32.mrb[0].mxu0
    %v2330 = vadd.f32 %v1724, %v2329
    %v2331 = vpop.f32.mrb[0].mxu0
    %2332 = vmatprep.mubr.bf16.mxu0 %v2043
    %2333 = vmatmul.mubr.bf16.gmra.mrb[0].mxu0 %v2042
    %v2334 = vpop.f32.mrb[0].mxu0
    %v2335 = vadd.f32 %v1729, %v2334
    %v2336 = vpop.f32.mrb[0].mxu0
    %v2337 = vpop.f32.mrb[0].mxu0
    %v2338 = vadd.f32 %v1734, %v2337
    %v2339 = vpop.f32.mrb[0].mxu0
    %2340 = vmatprep.mubr.bf16.mxu0 %v2047
    %2341 = vmatmul.mubr.bf16.gmra.mrb[0].mxu0 %v2046
    %v2342 = vpop.f32.mrb[0].mxu0
    %v2343 = vadd.f32 %v1739, %v2342
    %v2344 = vpop.f32.mrb[0].mxu0
    %v2345 = vpop.f32.mrb[0].mxu0
    %v2346 = vadd.f32 %v1744, %v2345
    %v2347 = vpop.f32.mrb[0].mxu0
    %2348 = vdwg.mxu0
    %2349 = vmatprep.subr.bf16.mxu0 0
    %2350 = vmatpush1.bf16.msra.mxu0 %v1509
    %2351 = vmatprep.subr.bf16.mxu0 0
    %2352 = vmatpush1.bf16.msra.mxu0 %v1510
    %2353 = vmatprep.subr.bf16.mxu0 0
    %2354 = vmatpush1.bf16.msra.mxu0 %v1511
    %2355 = vmatprep.subr.bf16.mxu0 0
    %2356 = vmatpush1.bf16.msra.mxu0 %v1512
    %2357 = vmatprep.subr.bf16.mxu0 0
    %2358 = vmatpush1.bf16.msra.mxu0 %v1513
    %2359 = vmatprep.subr.bf16.mxu0 0
    %2360 = vmatpush1.bf16.msra.mxu0 %v1514
    %2361 = vmatprep.subr.bf16.mxu0 0
    %2362 = vmatpush1.bf16.msra.mxu0 %v1515
    %2363 = vmatprep.subr.bf16.mxu0 0
    %2364 = vmatpush1.bf16.msra.mxu0 %v1516
    %2365 = vmatprep.subr.bf16.mxu0 0
    %2366 = vmatpush1.bf16.msra.mxu0 %v1517
    %2367 = vmatprep.subr.bf16.mxu0 0
    %2368 = vmatpush1.bf16.msra.mxu0 0
    %2369 = vmatprep.subr.bf16.mxu0 0
    %2370 = vmatpush1.bf16.msra.mxu0 0
    %2371 = vmatprep.subr.bf16.mxu0 0
    %2372 = vmatpush1.bf16.msra.mxu0 0
    %2373 = vmatprep.subr.bf16.mxu0 0
    %2374 = vmatpush1.bf16.msra.mxu0 0
    %2375 = vmatprep.subr.bf16.mxu0 0
    %2376 = vmatpush1.bf16.msra.mxu0 0
    %2377 = vmatprep.subr.bf16.mxu0 0
    %2378 = vmatpush1.bf16.msra.mxu0 0
    %2379 = vmatprep.subr.bf16.mxu0 0
    %2380 = vmatpush1.bf16.msra.mxu0 0
    %2381 = vmatprep.mubr.bf16.mxu0 %v2108
    %2382 = vmatmul.mubr.bf16.gmra.mrb[0].mxu0 %v1976
    %v2383 = vpop.f32.mrb[0].mxu0
    %v2384 = vadd.f32 %v2199, %v2383
    %v2385 = vpop.f32.mrb[0].mxu0
    %v2386 = vpop.f32.mrb[0].mxu0
    %v2387 = vadd.f32 %v2202, %v2386
    %v2388 = vpop.f32.mrb[0].mxu0
    %2389 = vmatprep.mubr.bf16.mxu0 %v2111
    %2390 = vmatmul.mubr.bf16.gmra.mrb[0].mxu0 %v1980
    %v2391 = vpop.f32.mrb[0].mxu0
    %v2392 = vadd.f32 %v2207, %v2391
    %v2393 = vpop.f32.mrb[0].mxu0
    %v2394 = vpop.f32.mrb[0].mxu0
    %v2395 = vadd.f32 %v2210, %v2394
    %v2396 = vpop.f32.mrb[0].mxu0
    %2397 = vmatprep.mubr.bf16.mxu0 %v2114
    %2398 = vmatmul.mubr.bf16.gmra.mrb[0].mxu0 %v1984
    %v2399 = vpop.f32.mrb[0].mxu0
    %v2400 = vadd.f32 %v2215, %v2399
    %v2401 = vpop.f32.mrb[0].mxu0
    %v2402 = vpop.f32.mrb[0].mxu0
    %v2403 = vadd.f32 %v2218, %v2402
    %v2404 = vpop.f32.mrb[0].mxu0
    %2405 = vmatprep.mubr.bf16.mxu0 %v2117
    %2406 = vmatmul.mubr.bf16.gmra.mrb[0].mxu0 %v1988
    %v2407 = vpop.f32.mrb[0].mxu0
    %v2408 = vadd.f32 %v2223, %v2407
    %v2409 = vpop.f32.mrb[0].mxu0
    %v2410 = vpop.f32.mrb[0].mxu0
    %v2411 = vadd.f32 %v2226, %v2410
    %v2412 = vpop.f32.mrb[0].mxu0
    %2413 = vmatprep.mubr.bf16.mxu0 %v2120
    %2414 = vmatmul.mubr.bf16.gmra.mrb[0].mxu0 %v1992
    %v2415 = vpop.f32.mrb[0].mxu0
    %v2416 = vadd.f32 %v2231, %v2415
    %v2417 = vpop.f32.mrb[0].mxu0
    %v2418 = vpop.f32.mrb[0].mxu0
    %v2419 = vadd.f32 %v2234, %v2418
    %v2420 = vpop.f32.mrb[0].mxu0
    %2421 = vmatprep.mubr.bf16.mxu0 %v2123
    %2422 = vmatmul.mubr.bf16.gmra.mrb[0].mxu0 %v1996
    %v2423 = vpop.f32.mrb[0].mxu0
    %v2424 = vadd.f32 %v2239, %v2423
    %v2425 = vpop.f32.mrb[0].mxu0
    %v2426 = vpop.f32.mrb[0].mxu0
    %v2427 = vadd.f32 %v2242, %v2426
    %v2428 = vpop.f32.mrb[0].mxu0
    %2429 = vmatprep.mubr.bf16.mxu0 %v2126
    %2430 = vmatmul.mubr.bf16.gmra.mrb[0].mxu0 %v2000
    %v2431 = vpop.f32.mrb[0].mxu0
    %v2432 = vadd.f32 %v2247, %v2431
    %v2433 = vpop.f32.mrb[0].mxu0
    %v2434 = vpop.f32.mrb[0].mxu0
    %v2435 = vadd.f32 %v2250, %v2434
    %v2436 = vpop.f32.mrb[0].mxu0
    %2437 = vmatprep.mubr.bf16.mxu0 %v2129
    %2438 = vmatmul.mubr.bf16.gmra.mrb[0].mxu0 %v2004
    %v2439 = vpop.f32.mrb[0].mxu0
    %v2440 = vadd.f32 %v2255, %v2439
    %v2441 = vpop.f32.mrb[0].mxu0
    %v2442 = vpop.f32.mrb[0].mxu0
    %v2443 = vadd.f32 %v2258, %v2442
    %v2444 = vpop.f32.mrb[0].mxu0
    %2445 = vmatprep.mubr.bf16.mxu0 %v2132
    %2446 = vmatmul.mubr.bf16.gmra.mrb[0].mxu0 %v2008
    %v2447 = vpop.f32.mrb[0].mxu0
    %v2448 = vadd.f32 %v2263, %v2447
    %v2449 = vpop.f32.mrb[0].mxu0
    %v2450 = vpop.f32.mrb[0].mxu0
    %v2451 = vadd.f32 %v2266, %v2450
    %v2452 = vpop.f32.mrb[0].mxu0
    %2453 = vmatprep.mubr.bf16.mxu0 %v2135
    %2454 = vmatmul.mubr.bf16.gmra.mrb[0].mxu0 %v2012
    %v2455 = vpop.f32.mrb[0].mxu0
    %v2456 = vadd.f32 %v2271, %v2455
    %v2457 = vpop.f32.mrb[0].mxu0
    %v2458 = vpop.f32.mrb[0].mxu0
    %v2459 = vadd.f32 %v2274, %v2458
    %v2460 = vpop.f32.mrb[0].mxu0
    %2461 = vmatprep.mubr.bf16.mxu0 %v2138
    %2462 = vmatmul.mubr.bf16.gmra.mrb[0].mxu0 %v2016
    %v2463 = vpop.f32.mrb[0].mxu0
    %v2464 = vadd.f32 %v2279, %v2463
    %v2465 = vpop.f32.mrb[0].mxu0
    %v2466 = vpop.f32.mrb[0].mxu0
    %v2467 = vadd.f32 %v2282, %v2466
    %v2468 = vpop.f32.mrb[0].mxu0
    %2469 = vmatprep.mubr.bf16.mxu0 %v2141
    %2470 = vmatmul.mubr.bf16.gmra.mrb[0].mxu0 %v2020
    %v2471 = vpop.f32.mrb[0].mxu0
    %v2472 = vadd.f32 %v2287, %v2471
    %v2473 = vpop.f32.mrb[0].mxu0
    %v2474 = vpop.f32.mrb[0].mxu0
    %v2475 = vadd.f32 %v2290, %v2474
    %v2476 = vpop.f32.mrb[0].mxu0
    %2477 = vmatprep.mubr.bf16.mxu0 %v2144
    %2478 = vmatmul.mubr.bf16.gmra.mrb[0].mxu0 %v2024
    %v2479 = vpop.f32.mrb[0].mxu0
    %v2480 = vadd.f32 %v2295, %v2479
    %v2481 = vpop.f32.mrb[0].mxu0
    %v2482 = vpop.f32.mrb[0].mxu0
    %v2483 = vadd.f32 %v2298, %v2482
    %v2484 = vpop.f32.mrb[0].mxu0
    %2485 = vmatprep.mubr.bf16.mxu0 %v2147
    %2486 = vmatmul.mubr.bf16.gmra.mrb[0].mxu0 %v2028
    %v2487 = vpop.f32.mrb[0].mxu0
    %v2488 = vadd.f32 %v2303, %v2487
    %v2489 = vpop.f32.mrb[0].mxu0
    %v2490 = vpop.f32.mrb[0].mxu0
    %v2491 = vadd.f32 %v2306, %v2490
    %v2492 = vpop.f32.mrb[0].mxu0
    %2493 = vmatprep.mubr.bf16.mxu0 %v2150
    %2494 = vmatmul.mubr.bf16.gmra.mrb[0].mxu0 %v2032
    %v2495 = vpop.f32.mrb[0].mxu0
    %v2496 = vadd.f32 %v2311, %v2495
    %v2497 = vpop.f32.mrb[0].mxu0
    %v2498 = vpop.f32.mrb[0].mxu0
    %v2499 = vadd.f32 %v2314, %v2498
    %v2500 = vpop.f32.mrb[0].mxu0
    %2501 = vmatprep.mubr.bf16.mxu0 %v2153
    %2502 = vmatmul.mubr.bf16.gmra.mrb[0].mxu0 %v2036
    %v2503 = vpop.f32.mrb[0].mxu0
    %v2504 = vadd.f32 %v2319, %v2503
    %v2505 = vpop.f32.mrb[0].mxu0
    %v2506 = vpop.f32.mrb[0].mxu0
    %v2507 = vadd.f32 %v2322, %v2506
    %v2508 = vpop.f32.mrb[0].mxu0
    %2509 = vmatprep.mubr.bf16.mxu0 %v2156
    %2510 = vmatmul.mubr.bf16.gmra.mrb[0].mxu0 %v2040
    %v2511 = vpop.f32.mrb[0].mxu0
    %v2512 = vadd.f32 %v2327, %v2511
    %v2513 = vpop.f32.mrb[0].mxu0
    %v2514 = vpop.f32.mrb[0].mxu0
    %v2515 = vadd.f32 %v2330, %v2514
    %v2516 = vpop.f32.mrb[0].mxu0
    %2517 = vmatprep.mubr.bf16.mxu0 %v2159
    %2518 = vmatmul.mubr.bf16.gmra.mrb[0].mxu0 %v2044
    %v2519 = vpop.f32.mrb[0].mxu0
    %v2520 = vadd.f32 %v2335, %v2519
    %v2521 = vpop.f32.mrb[0].mxu0
    %v2522 = vpop.f32.mrb[0].mxu0
    %v2523 = vadd.f32 %v2338, %v2522
    %v2524 = vpop.f32.mrb[0].mxu0
    %2525 = vmatprep.mubr.bf16.mxu0 %v2162
    %2526 = vmatmul.mubr.bf16.gmra.mrb[0].mxu0 %v2048
    %v2527 = vpop.f32.mrb[0].mxu0
    %v2528 = vadd.f32 %v2343, %v2527
    %v2529 = vpop.f32.mrb[0].mxu0
    %v2530 = vpop.f32.mrb[0].mxu0
    %v2531 = vadd.f32 %v2346, %v2530
    %v2532 = vpop.f32.mrb[0].mxu0
    %2533 = vdwg.mxu0
    %v2534 = vmax.f32 %v2384, 0.0
    %v2535 = vmax.f32 %v2387, 0.0
    %v2536 = vmax.f32 %v2392, 0.0
    %v2537 = vmax.f32 %v2395, 0.0
    %v2538 = vmax.f32 %v2400, 0.0
    %v2539 = vmax.f32 %v2403, 0.0
    %v2540 = vmax.f32 %v2408, 0.0
    %v2541 = vmax.f32 %v2411, 0.0
    %v2542 = vmax.f32 %v2416, 0.0
    %v2543 = vmax.f32 %v2419, 0.0
    %v2544 = vmax.f32 %v2424, 0.0
    %v2545 = vmax.f32 %v2427, 0.0
    %v2546 = vmax.f32 %v2432, 0.0
    %v2547 = vmax.f32 %v2435, 0.0
    %v2548 = vmax.f32 %v2440, 0.0
    %v2549 = vmax.f32 %v2443, 0.0
    %v2550 = vmax.f32 %v2448, 0.0
    %v2551 = vmax.f32 %v2451, 0.0
    %v2552 = vmax.f32 %v2456, 0.0
    %v2553 = vmax.f32 %v2459, 0.0
    %v2554 = vmax.f32 %v2464, 0.0
    %v2555 = vmax.f32 %v2467, 0.0
    %v2556 = vmax.f32 %v2472, 0.0
    %v2557 = vmax.f32 %v2475, 0.0
    %v2558 = vmax.f32 %v2480, 0.0
    %v2559 = vmax.f32 %v2483, 0.0
    %v2560 = vmax.f32 %v2488, 0.0
    %v2561 = vmax.f32 %v2491, 0.0
    %v2562 = vmax.f32 %v2496, 0.0
    %v2563 = vmax.f32 %v2499, 0.0
    %v2564 = vmax.f32 %v2504, 0.0
    %v2565 = vmax.f32 %v2507, 0.0
    %v2566 = vmax.f32 %v2512, 0.0
    %v2567 = vmax.f32 %v2515, 0.0
    %v2568 = vmax.f32 %v2520, 0.0
    %v2569 = vmax.f32 %v2523, 0.0
    %v2570 = vmax.f32 %v2528, 0.0
    %v2571 = vmax.f32 %v2531, 0.0
    %v2572 = vld [vmem:[%s7] sm:$0xff]
    %v2573 = vld [vmem:[%s7 + $0x8] sm:$0xff]
    %v2574 = vld [vmem:[%s7 + $0x10] sm:$0xff]
    %v2575 = vld [vmem:[%s7 + $0x18] sm:$0xff]
    %v2576 = vld [vmem:[%s7 + $0x20] sm:$0xff]
    %v2577 = vld [vmem:[%s7 + $0x28] sm:$0xff]
    %v2578 = vld [vmem:[%s7 + $0x30] sm:$0xff]
    %v2579 = vld [vmem:[%s7 + $0x38] sm:$0xff]
    %v2580 = vld [vmem:[%s7 + $0x40] sm:$0xff]
    %v2581 = vld [vmem:[%s7 + $0x48] sm:$0xff]
    %v2582 = vld [vmem:[%s7 + $0x50] sm:$0xff]
    %v2583 = vld [vmem:[%s7 + $0x58] sm:$0xff]
    %v2584 = vld [vmem:[%s7 + $0x60] sm:$0xff]
    %v2585 = vld [vmem:[%s7 + $0x68] sm:$0xff]
    %v2586 = vld [vmem:[%s7 + $0x70] sm:$0xff]
    %v2587 = vld [vmem:[%s7 + $0x78] sm:$0xff]
    %v2588 = vld [vmem:[%s7 + $0x80] sm:$0xff]
    %v2589 = vld [vmem:[%s7 + $0x88] sm:$0xff]
    %v2590 = vld [vmem:[%s7 + $0x90] sm:$0xff]
    %v2591 = vld [vmem:[%s7 + $0x98] sm:$0xff]
    %v2592 = vld [vmem:[%s7 + $0xa0] sm:$0xff]
    %v2593 = vld [vmem:[%s7 + $0xa8] sm:$0xff]
    %v2594 = vld [vmem:[%s7 + $0xb0] sm:$0xff]
    %v2595 = vld [vmem:[%s7 + $0xb8] sm:$0xff]
    %v2596 = vld [vmem:[%s7 + $0xc0] sm:$0xff]
    %v2597 = vld [vmem:[%s7 + $0xc8] sm:$0xff]
    %v2598 = vld [vmem:[%s7 + $0xd0] sm:$0xff]
    %v2599 = vld [vmem:[%s7 + $0xd8] sm:$0xff]
    %v2600 = vld [vmem:[%s7 + $0xe0] sm:$0xff]
    %v2601 = vld [vmem:[%s7 + $0xe8] sm:$0xff]
    %v2602 = vld [vmem:[%s7 + $0xf0] sm:$0xff]
    %v2603 = vld [vmem:[%s7 + $0xf8] sm:$0xff]
    %v2604 = vld [vmem:[%s7 + $0x100] sm:$0xff]
    %v2605 = vld [vmem:[%s7 + $0x108] sm:$0xff]
    %v2606 = vld [vmem:[%s7 + $0x110] sm:$0xff]
    %v2607 = vld [vmem:[%s7 + $0x118] sm:$0xff]
    %v2608 = vld [vmem:[%s7 + $0x120] sm:$0xff]
    %v2609 = vld [vmem:[%s7 + $0x128] sm:$0xf]
    %2611 = vset.pattern.permute.xlu0 0
    %2612 = vperm.xlu0 %2611, %v2572
    %v2613 = vpop.permute.xlu0 %2612
    %2616 = vset.pattern.permute.xlu0 0
    %2617 = vperm.xlu0 %2616, %v2573
    %v2618 = vpop.permute.xlu0 %2617
    %2621 = vset.pattern.permute.xlu0 0
    %2622 = vperm.xlu0 %2621, %v2574
    %v2623 = vpop.permute.xlu0 %2622
    %2626 = vset.pattern.permute.xlu0 0
    %2627 = vperm.xlu0 %2626, %v2575
    %v2628 = vpop.permute.xlu0 %2627
    %2631 = vset.pattern.permute.xlu0 0
    %2632 = vperm.xlu0 %2631, %v2576
    %v2633 = vpop.permute.xlu0 %2632
    %2636 = vset.pattern.permute.xlu0 0
    %2637 = vperm.xlu0 %2636, %v2577
    %v2638 = vpop.permute.xlu0 %2637
    %2641 = vset.pattern.permute.xlu0 0
    %2642 = vperm.xlu0 %2641, %v2578
    %v2643 = vpop.permute.xlu0 %2642
    %2646 = vset.pattern.permute.xlu0 0
    %2647 = vperm.xlu0 %2646, %v2579
    %v2648 = vpop.permute.xlu0 %2647
    %2651 = vset.pattern.permute.xlu0 0
    %2652 = vperm.xlu0 %2651, %v2580
    %v2653 = vpop.permute.xlu0 %2652
    %2656 = vset.pattern.permute.xlu0 0
    %2657 = vperm.xlu0 %2656, %v2581
    %v2658 = vpop.permute.xlu0 %2657
    %2661 = vset.pattern.permute.xlu0 0
    %2662 = vperm.xlu0 %2661, %v2582
    %v2663 = vpop.permute.xlu0 %2662
    %2666 = vset.pattern.permute.xlu0 0
    %2667 = vperm.xlu0 %2666, %v2583
    %v2668 = vpop.permute.xlu0 %2667
    %2671 = vset.pattern.permute.xlu0 0
    %2672 = vperm.xlu0 %2671, %v2584
    %v2673 = vpop.permute.xlu0 %2672
    %2676 = vset.pattern.permute.xlu0 0
    %2677 = vperm.xlu0 %2676, %v2585
    %v2678 = vpop.permute.xlu0 %2677
    %2681 = vset.pattern.permute.xlu0 0
    %2682 = vperm.xlu0 %2681, %v2586
    %v2683 = vpop.permute.xlu0 %2682
    %2686 = vset.pattern.permute.xlu0 0
    %2687 = vperm.xlu0 %2686, %v2587
    %v2688 = vpop.permute.xlu0 %2687
    %2691 = vset.pattern.permute.xlu0 0
    %2692 = vperm.xlu0 %2691, %v2588
    %v2693 = vpop.permute.xlu0 %2692
    %2696 = vset.pattern.permute.xlu0 0
    %2697 = vperm.xlu0 %2696, %v2589
    %v2698 = vpop.permute.xlu0 %2697
    %2701 = vset.pattern.permute.xlu0 0
    %2702 = vperm.xlu0 %2701, %v2590
    %v2703 = vpop.permute.xlu0 %2702
    %2706 = vset.pattern.permute.xlu0 0
    %2707 = vperm.xlu0 %2706, %v2591
    %v2708 = vpop.permute.xlu0 %2707
    %2711 = vset.pattern.permute.xlu0 0
    %2712 = vperm.xlu0 %2711, %v2592
    %v2713 = vpop.permute.xlu0 %2712
    %2716 = vset.pattern.permute.xlu0 0
    %2717 = vperm.xlu0 %2716, %v2593
    %v2718 = vpop.permute.xlu0 %2717
    %2721 = vset.pattern.permute.xlu0 0
    %2722 = vperm.xlu0 %2721, %v2594
    %v2723 = vpop.permute.xlu0 %2722
    %2726 = vset.pattern.permute.xlu0 0
    %2727 = vperm.xlu0 %2726, %v2595
    %v2728 = vpop.permute.xlu0 %2727
    %2731 = vset.pattern.permute.xlu0 0
    %2732 = vperm.xlu0 %2731, %v2596
    %v2733 = vpop.permute.xlu0 %2732
    %2736 = vset.pattern.permute.xlu0 0
    %2737 = vperm.xlu0 %2736, %v2597
    %v2738 = vpop.permute.xlu0 %2737
    %2741 = vset.pattern.permute.xlu0 0
    %2742 = vperm.xlu0 %2741, %v2598
    %v2743 = vpop.permute.xlu0 %2742
    %2746 = vset.pattern.permute.xlu0 0
    %2747 = vperm.xlu0 %2746, %v2599
    %v2748 = vpop.permute.xlu0 %2747
    %2751 = vset.pattern.permute.xlu0 0
    %2752 = vperm.xlu0 %2751, %v2600
    %v2753 = vpop.permute.xlu0 %2752
    %2756 = vset.pattern.permute.xlu0 0
    %2757 = vperm.xlu0 %2756, %v2601
    %v2758 = vpop.permute.xlu0 %2757
    %2761 = vset.pattern.permute.xlu0 0
    %2762 = vperm.xlu0 %2761, %v2602
    %v2763 = vpop.permute.xlu0 %2762
    %2766 = vset.pattern.permute.xlu0 0
    %2767 = vperm.xlu0 %2766, %v2603
    %v2768 = vpop.permute.xlu0 %2767
    %2771 = vset.pattern.permute.xlu0 0
    %2772 = vperm.xlu0 %2771, %v2604
    %v2773 = vpop.permute.xlu0 %2772
    %2776 = vset.pattern.permute.xlu0 0
    %2777 = vperm.xlu0 %2776, %v2605
    %v2778 = vpop.permute.xlu0 %2777
    %2781 = vset.pattern.permute.xlu0 0
    %2782 = vperm.xlu0 %2781, %v2606
    %v2783 = vpop.permute.xlu0 %2782
    %2786 = vset.pattern.permute.xlu0 0
    %2787 = vperm.xlu0 %2786, %v2607
    %v2788 = vpop.permute.xlu0 %2787
    %2791 = vset.pattern.permute.xlu0 0
    %2792 = vperm.xlu0 %2791, %v2608
    %v2793 = vpop.permute.xlu0 %2792
    %2796 = vset.pattern.permute.xlu0 0
    %2797 = vperm.xlu0 %2796, %v2609
    %v2798 = vpop.permute.xlu0 %2797
    %v2800 = vmul.f32 %v2534, %v2613
    %v2801 = vmul.f32 %v2535, %v2618
    %v2802 = vmul.f32 %v2536, %v2623
    %v2803 = vmul.f32 %v2537, %v2628
    %v2804 = vmul.f32 %v2538, %v2633
    %v2805 = vmul.f32 %v2539, %v2638
    %v2806 = vmul.f32 %v2540, %v2643
    %v2807 = vmul.f32 %v2541, %v2648
    %v2808 = vmul.f32 %v2542, %v2653
    %v2809 = vmul.f32 %v2543, %v2658
    %v2810 = vmul.f32 %v2544, %v2663
    %v2811 = vmul.f32 %v2545, %v2668
    %v2812 = vmul.f32 %v2546, %v2673
    %v2813 = vmul.f32 %v2547, %v2678
    %v2814 = vmul.f32 %v2548, %v2683
    %v2815 = vmul.f32 %v2549, %v2688
    %v2816 = vmul.f32 %v2550, %v2693
    %v2817 = vmul.f32 %v2551, %v2698
    %v2818 = vmul.f32 %v2552, %v2703
    %v2819 = vmul.f32 %v2553, %v2708
    %v2820 = vmul.f32 %v2554, %v2713
    %v2821 = vmul.f32 %v2555, %v2718
    %v2822 = vmul.f32 %v2556, %v2723
    %v2823 = vmul.f32 %v2557, %v2728
    %v2824 = vmul.f32 %v2558, %v2733
    %v2825 = vmul.f32 %v2559, %v2738
    %v2826 = vmul.f32 %v2560, %v2743
    %v2827 = vmul.f32 %v2561, %v2748
    %v2828 = vmul.f32 %v2562, %v2753
    %v2829 = vmul.f32 %v2563, %v2758
    %v2830 = vmul.f32 %v2564, %v2763
    %v2831 = vmul.f32 %v2565, %v2768
    %v2832 = vmul.f32 %v2566, %v2773
    %v2833 = vmul.f32 %v2567, %v2778
    %v2834 = vmul.f32 %v2568, %v2783
    %v2835 = vmul.f32 %v2569, %v2788
    %v2836 = vmul.f32 %v2570, %v2793
    %v2837 = vmul.f32 %v2571, %v2798
    %vm2838 = vcmask 31744
    %v2839 = vsel %vm2838, %v2800, 0.0
    %v2840 = vsel %vm2838, %v2801, 0.0
    %v2841 = vadd.f32 %v2839, %v2840
    %v2842 = vsel %vm2838, %v2802, 0.0
    %v2843 = vadd.f32 %v2841, %v2842
    %v2844 = vsel %vm2838, %v2803, 0.0
    %v2845 = vadd.f32 %v2843, %v2844
    %v2846 = vsel %vm2838, %v2804, 0.0
    %v2847 = vadd.f32 %v2845, %v2846
    %v2848 = vsel %vm2838, %v2805, 0.0
    %v2849 = vadd.f32 %v2847, %v2848
    %v2850 = vsel %vm2838, %v2806, 0.0
    %v2851 = vadd.f32 %v2849, %v2850
    %v2852 = vsel %vm2838, %v2807, 0.0
    %v2853 = vadd.f32 %v2851, %v2852
    %v2854 = vsel %vm2838, %v2808, 0.0
    %v2855 = vadd.f32 %v2853, %v2854
    %v2856 = vsel %vm2838, %v2809, 0.0
    %v2857 = vadd.f32 %v2855, %v2856
    %v2858 = vsel %vm2838, %v2810, 0.0
    %v2859 = vadd.f32 %v2857, %v2858
    %v2860 = vsel %vm2838, %v2811, 0.0
    %v2861 = vadd.f32 %v2859, %v2860
    %v2862 = vsel %vm2838, %v2812, 0.0
    %v2863 = vadd.f32 %v2861, %v2862
    %v2864 = vsel %vm2838, %v2813, 0.0
    %v2865 = vadd.f32 %v2863, %v2864
    %v2866 = vsel %vm2838, %v2814, 0.0
    %v2867 = vadd.f32 %v2865, %v2866
    %v2868 = vsel %vm2838, %v2815, 0.0
    %v2869 = vadd.f32 %v2867, %v2868
    %v2870 = vsel %vm2838, %v2816, 0.0
    %v2871 = vadd.f32 %v2869, %v2870
    %v2872 = vsel %vm2838, %v2817, 0.0
    %v2873 = vadd.f32 %v2871, %v2872
    %v2874 = vsel %vm2838, %v2818, 0.0
    %v2875 = vadd.f32 %v2873, %v2874
    %v2876 = vsel %vm2838, %v2819, 0.0
    %v2877 = vadd.f32 %v2875, %v2876
    %v2878 = vsel %vm2838, %v2820, 0.0
    %v2879 = vadd.f32 %v2877, %v2878
    %v2880 = vsel %vm2838, %v2821, 0.0
    %v2881 = vadd.f32 %v2879, %v2880
    %v2882 = vsel %vm2838, %v2822, 0.0
    %v2883 = vadd.f32 %v2881, %v2882
    %v2884 = vsel %vm2838, %v2823, 0.0
    %v2885 = vadd.f32 %v2883, %v2884
    %v2886 = vsel %vm2838, %v2824, 0.0
    %v2887 = vadd.f32 %v2885, %v2886
    %v2888 = vsel %vm2838, %v2825, 0.0
    %v2889 = vadd.f32 %v2887, %v2888
    %v2890 = vsel %vm2838, %v2826, 0.0
    %v2891 = vadd.f32 %v2889, %v2890
    %v2892 = vsel %vm2838, %v2827, 0.0
    %v2893 = vadd.f32 %v2891, %v2892
    %v2894 = vsel %vm2838, %v2828, 0.0
    %v2895 = vadd.f32 %v2893, %v2894
    %v2896 = vsel %vm2838, %v2829, 0.0
    %v2897 = vadd.f32 %v2895, %v2896
    %v2898 = vsel %vm2838, %v2830, 0.0
    %v2899 = vadd.f32 %v2897, %v2898
    %v2900 = vsel %vm2838, %v2831, 0.0
    %v2901 = vadd.f32 %v2899, %v2900
    %v2902 = vsel %vm2838, %v2832, 0.0
    %v2903 = vadd.f32 %v2901, %v2902
    %v2904 = vsel %vm2838, %v2833, 0.0
    %v2905 = vadd.f32 %v2903, %v2904
    %v2906 = vsel %vm2838, %v2834, 0.0
    %v2907 = vadd.f32 %v2905, %v2906
    %v2908 = vsel %vm2838, %v2835, 0.0
    %v2909 = vadd.f32 %v2907, %v2908
    %v2910 = vsel %vm2838, %v2836, 0.0
    %v2911 = vadd.f32 %v2909, %v2910
    %vm2912 = vcmask 27648
    %v2913 = vsel %vm2912, %v2837, 0.0
    %v2914 = vadd.f32 %v2911, %v2913
    %v2915 = vrot.slane %v2914, 4
    %v2916 = vadd.f32 %v2914, %v2915
    %v2917 = vrot.slane %v2916, 2
    %v2918 = vadd.f32 %v2916, %v2917
    %v2919 = vrot.slane %v2918, 1
    %v2920 = vadd.f32 %v2918, %v2919
    %v2921 = vld [vmem:[#allocation2] sm:$0x1]
    %2923 = vset.pattern.permute.xlu0 0
    %2924 = vperm.xlu0 %2923, %v2921
    %v2925 = vpop.permute.xlu0 %2924
    %v2927 = vlaneseq
    %v2928 = vshrl.u32 %v2927, 7
    %v2929 = vsub.s32 0, %v2928
    %v2930 = vrot.slane %v2925, %v2929
    %v2931 = vadd.f32 %v2920, %v2930
    %vm2932 = vcmask 24576
    %2933 = vst.msk [vmem:[#allocation3] sm:$0x1] %vm2932, %v2931
    // Predicated region
    $region38: #{dummy_critic_forward.1} parent=1 // pred_check
      _
    $region39: #{dummy_critic_forward.1} parent=1 // pred_check_branch
      %2935 = sbr.rel (0) target = $region41
    $region40: #{dummy_critic_forward.1} parent=1 // pred_region
      %s2937 = ssub.s32 16, 16
      %2938 = vsyncadd [#allocation4], %s2937
      %s2940 = sshll.u32 [#allocation3], 4
      %s2941 = int_to_ptr.vmem [resolvable:$true] %s2940
      %2943 = dma.vmem_to_hbm [thread:$0]  %s2941, 16, %s9, [#allocation4]
    $region41: #{dummy_critic_forward.1} parent=1 // pred_fallthru
      _
    // Predicated region
    $region42: #{dummy_critic_forward.1} parent=1 // pred_check
      _
    $region43: #{dummy_critic_forward.1} parent=1 // pred_check_branch
      %2945 = sbr.rel (0) target = $region45
    $region44: #{dummy_critic_forward.1} parent=1 // pred_region
      %2946 = dma.done [#allocation4], 16
    $region45: #{dummy_critic_forward.1} parent=1 // pred_fallthru
      _
    %2947 = vsyncpa [#allocation4], 1

</llo_original>
